<compile_context>
chip_gen: v5e
topology: v5e:2x2
jax: 0.10.0
libtpu: 0.0.40
codegen_flags: <defaults>
</compile_context>

<pallas_src>
import jax
import jax.numpy as jnp
from jax import lax
from jax.experimental import pallas as pl
from jax.experimental.pallas import tpu as pltpu

F32 = jnp.float32
BF16 = jnp.bfloat16
EPS = 1e-9


def _mm(a, w):
    """bf16 MXU matmul with f32 accumulation."""
    return jnp.dot(a.astype(BF16), w, preferred_element_type=F32)


def _full_spec(shape):
    nd = len(shape)
    return pl.BlockSpec(tuple(shape), lambda *args, n=nd: (0,) * n)


# --------------------------------------------------------------------- K1: core
def core_kernel(yemb_r, h0_r, c0_r, ctd_r, ctg_r, ctg2_r, encf_r, nodef_r,
                Wx_r, bx_r, Wih_r, Whh_r, bl_r,
                Wds_r, bds_r, Wfs_r, bfs_r, Wdh_r, Wfh_r,
                x_o, h_o, c_o, dfd_o, dff_o, ef_o, nf_o):
    H = h0_r.shape[1]
    E = yemb_r.shape[1]

    # x = x_context(cat(c_t_d, c_t_g, c_t_g2, emb(y_{t-1})))  -- sliced weights, no concat
    x = (_mm(ctd_r[...], Wx_r[0:H, :]) + _mm(ctg_r[...], Wx_r[H:2 * H, :])
         + _mm(ctg2_r[...], Wx_r[2 * H:3 * H, :])
         + _mm(yemb_r[...], Wx_r[3 * H:3 * H + E, :]) + bx_r[...])          # (B, E)

    # single-step LSTM cell (PyTorch gate order i, f, g, o)
    gates = _mm(x, Wih_r[...]) + _mm(h0_r[...], Whh_r[...]) + bl_r[...]     # (B, 4H)
    i_g = jax.nn.sigmoid(gates[:, 0:H])
    f_g = jax.nn.sigmoid(gates[:, H:2 * H])
    g_g = jnp.tanh(gates[:, 2 * H:3 * H])
    o_g = jax.nn.sigmoid(gates[:, 3 * H:4 * H])
    c_t = f_g * c0_r[...] + i_g * g_g
    h_t = o_g * jnp.tanh(c_t)

    x_o[...] = x
    h_o[...] = h_t
    c_o[...] = c_t

    # decoder-side features of both attentions (s_hat = [h_t, c_t], sliced weights)
    dfd_o[...] = _mm(h_t, Wds_r[0:H, :]) + _mm(c_t, Wds_r[H:2 * H, :]) + bds_r[...]
    dff_o[...] = _mm(h_t, Wfs_r[0:H, :]) + _mm(c_t, Wfs_r[H:2 * H, :]) + bfs_r[...]

    # encoder / node projections computed flat: (B*T, H) @ (H, 2H) -> full MXU rows.
    # TODO(synk): step-invariant; hoist out of the per-step call when used in a decode loop.
    ef_o[...] = jnp.dot(encf_r[...], Wdh_r[...], preferred_element_type=F32)
    nf_o[...] = jnp.dot(nodef_r[...], Wfh_r[...], preferred_element_type=F32)


# ---------------------------------------------------------------- K2: attention
def attention_kernel(encout_r, encnode_r, encfeat_r, nodefeat_r,
                     dfd_r, dff_r, vd_r, vf_r, wdc_r, wff_r,
                     maskt_r, maskn_r, cov_r, flow_r, n2t_r, graph_r,
                     ctd_o, ctg_o, ctg2_o, attn_o, an2t_o, flowu_o):
    enc_out = encout_r[...]         # (B, TK, H)  bf16
    enc_node = encnode_r[...]       # (B, NK, H)  bf16

    # ---- Doc_Attention: additive attention over tokens with coverage feature
    cov_feat = cov_r[...] * wdc_r[...]                         # (B,TK,1)*(1,1,2H)->(B,TK,2H)
    e_d = jnp.tanh(encfeat_r[...] + dfd_r[...] + cov_feat)
    sc_d = jnp.einsum('bqf,btf->bqt', vd_r[...], e_d,
                      preferred_element_type=F32)              # (B, 1, TK)
    ex_d = jnp.exp(sc_d - jnp.max(sc_d, axis=-1, keepdims=True)) * maskt_r[...]
    attn = ex_d * pl.reciprocal(jnp.sum(ex_d, axis=-1, keepdims=True) + EPS, approx=True)
    attn_o[...] = attn
    ctd_o[...] = jnp.einsum('bqt,bth->bqh', attn.astype(BF16), enc_out,
                            preferred_element_type=F32)        # (B, 1, H)

    # ---- Flow_Attention_only_node_improve_x: node attention with flow feature
    flow_feat = flow_r[...] * wff_r[...]                       # (B,NK,1)*(1,1,2H)->(B,NK,2H)
    e_f = jnp.tanh(nodefeat_r[...] + dff_r[...] + flow_feat)
    sc_f = jnp.einsum('bqf,bnf->bqn', vf_r[...], e_f,
                      preferred_element_type=F32)              # (B, 1, NK)
    ex_f = jnp.exp(sc_f - jnp.max(sc_f, axis=-1, keepdims=True)) * maskn_r[...]
    attn_n = ex_f * pl.reciprocal(jnp.sum(ex_f, axis=-1, keepdims=True) + EPS, approx=True)
    attn_n_b = attn_n.astype(BF16)
    ctg_o[...] = jnp.einsum('bqn,bnh->bqh', attn_n_b, enc_node,
                            preferred_element_type=F32)        # (B, 1, H)

    # node -> token distribution (node_to_token used in original [B, NK, TK] layout)
    a_n2t = jnp.einsum('bqn,bnt->bqt', attn_n_b, n2t_r[...],
                       preferred_element_type=F32)             # (B, 1, TK)
    an2t_o[...] = a_n2t * pl.reciprocal(jnp.sum(a_n2t, axis=-1, keepdims=True) + EPS,
                                        approx=True)

    # one-hop graph propagation of the node attention -> second graph context
    attn2 = jnp.einsum('bqn,bnm->bqm', attn_n_b, graph_r[...],
                       preferred_element_type=F32)             # (B, 1, NK)
    attn2 = attn2 * maskn_r[...]
    attn2 = attn2 * pl.reciprocal(jnp.sum(attn2, axis=-1, keepdims=True) + EPS, approx=True)
    ctg2_o[...] = jnp.einsum('bqm,bmh->bqh', attn2.astype(BF16), enc_node,
                             preferred_element_type=F32)       # (B, 1, H)

    # flow update (unnormalized): flow_[b, n] = max_t attn[b, t] * node_to_token[b, n, t]
    ade = attn * n2t_r[...].astype(F32)                        # (B, NK, TK)
    flowu_o[...] = jnp.max(ade, axis=-1, keepdims=True)        # (B, NK, 1)


# --------------------------------------------------------------- K3: head stats
def head_stats_kernel(h_r, c_r, x_r, ctd_r, ctg_r, ctg2_r, attn_r,
                      Wp_r, bp_r, Wo1_r, bo1_r, Wo2_r, bo2_r,
                      pgen_o, attnw_o, h1_o, m_o, l_o, logits_o):
    H = h_r.shape[1]
    E = x_r.shape[1]
    v = pl.program_id(0)

    @pl.when(v == 0)
    def _():
        h_t, c_t, x = h_r[...], c_r[...], x_r[...]
        ctd, ctg, ctg2 = ctd_r[...], ctg_r[...], ctg2_r[...]
        # p_gen = sigmoid(cat(c_t_d, c_t_g, c_t_g2, s_hat, x) @ Wp + bp)  (sliced weights)
        z = (_mm(ctd, Wp_r[0:H, :]) + _mm(ctg, Wp_r[H:2 * H, :])
             + _mm(ctg2, Wp_r[2 * H:3 * H, :]) + _mm(h_t, Wp_r[3 * H:4 * H, :])
             + _mm(c_t, Wp_r[4 * H:5 * H, :]) + _mm(x, Wp_r[5 * H:5 * H + E, :])
             + bp_r[...])
        p_gen = jax.nn.sigmoid(z)                                           # (B, 1)
        pgen_o[...] = p_gen
        # attn already sums to 1 after the mask renorm; the reference's extra
        # attn / attn.sum() renormalization is a mathematical no-op and is omitted.
        attnw_o[...] = (1.0 - p_gen) * attn_r[...]                          # (B, TK)
        # out1(cat(h_t, c_t_d, c_t_g, c_t_g2))
        h1_o[...] = (_mm(h_t, Wo1_r[0:H, :]) + _mm(ctd, Wo1_r[H:2 * H, :])
                     + _mm(ctg, Wo1_r[2 * H:3 * H, :]) + _mm(ctg2, Wo1_r[3 * H:4 * H, :])
                     + bo1_r[...])                                          # (B, H)
        m_o[...] = jnp.full(m_o.shape, -1e30, dtype=F32)
        l_o[...] = jnp.zeros(l_o.shape, dtype=F32)

    # out2 logits for this vocab tile + streaming (flash-style) softmax statistics
    logits = _mm(h1_o[...], Wo2_r[...]) + bo2_r[...]                        # (B, Vt)
    logits_o[...] = logits
    t_max = jnp.max(logits, axis=-1, keepdims=True)                         # (B, 1)
    m_old = m_o[...]
    m_new = jnp.maximum(m_old, t_max)
    l_o[...] = (l_o[...] * jnp.exp(m_old - m_new)
                + jnp.sum(jnp.exp(logits - m_new), axis=-1, keepdims=True))
    m_o[...] = m_new


# --------------------------------------------------------------- K4: head final
def head_final_kernel(logits_r, m_r, l_r, pgen_r, attnw_r, vocd_r, final_o):
    B, _, TK = attnw_r.shape
    Vt = logits_r.shape[2]
    v = pl.program_id(0)

    logits = logits_r[...]                                                  # (B, 1, Vt)
    vocab = jnp.exp(logits - m_r[...]) * pl.reciprocal(l_r[...], approx=True)

    # scatter_add(1, voc_d, (1-p_gen)*attn) restricted to this vocab tile, expressed
    # as an (iota == id) one-hot contraction on the MXU.
    # TODO(synk): out-of-range ids silently drop mass (torch scatter_add would error).
    ids = lax.broadcasted_iota(jnp.int32, (B, TK, Vt), 2)
    rel = vocd_r[...] - v * Vt                                              # (B, TK, 1)
    onehot = (ids == rel).astype(F32)                                       # (B, TK, Vt)
    scat = jnp.einsum('bqt,btv->bqv', attnw_r[...], onehot,
                      preferred_element_type=F32)                           # (B, 1, Vt)
    final_o[...] = pgen_r[...] * vocab + scat


# ------------------------------------------------------------------- wrapper
def decoder_step(params, y_t_1, s_t_1, encoder_outputs, encoder_outputs_node,
                 enc_padding_mask, enc_padding_mask_node, c_t_d, c_t_g, c_t_g2,
                 coverage, flow, node_to_token, graph, voc_d, step=0):
    del step  # unused by the reference forward
    B, TK, H = encoder_outputs.shape
    NK = encoder_outputs_node.shape[1]
    E = params['Wx'].shape[1]
    V = params['Wo2'].shape[1]
    H2 = 2 * H

    # ---- host-side glue (embedding lookup, casts, free reshapes)
    y_emb = params['emb'][y_t_1].astype(F32)                                # (B, E)
    h0 = jnp.reshape(s_t_1[0], (B, H)).astype(F32)
    c0 = jnp.reshape(s_t_1[1], (B, H)).astype(F32)
    enc_out_b = encoder_outputs.astype(BF16)
    enc_node_b = encoder_outputs_node.astype(BF16)

    # ---- kernel 1: x_context + LSTM cell + projections (2D, whole batch)
    k1_in = [
        y_emb, h0, c0,
        c_t_d.astype(F32), c_t_g.astype(F32), c_t_g2.astype(F32),
        enc_out_b.reshape(B * TK, H), enc_node_b.reshape(B * NK, H),
        params['Wx'].astype(BF16), params['bx'].astype(F32),
        params['Wih'].astype(BF16), params['Whh'].astype(BF16), params['bl'].astype(F32),
        params['Wds'].astype(BF16), params['bds'].astype(F32),
        params['Wfs'].astype(BF16), params['bfs'].astype(F32),
        params['Wdh'].astype(BF16), params['Wfh'].astype(BF16),
    ]
    k1_out = (
        jax.ShapeDtypeStruct((B, E), F32),        # x
        jax.ShapeDtypeStruct((B, H), F32),        # h_t
        jax.ShapeDtypeStruct((B, H), F32),        # c_t
        jax.ShapeDtypeStruct((B, H2), F32),       # dec feature (doc attn)
        jax.ShapeDtypeStruct((B, H2), F32),       # dec feature (flow attn)
        jax.ShapeDtypeStruct((B * TK, H2), F32),  # enc_feat (flat)
        jax.ShapeDtypeStruct((B * NK, H2), F32),  # node_feat (flat)
    )
    x, h_t, c_t, dfd, dff, encf, nodef = pl.pallas_call(
        core_kernel, grid=(1,),
        in_specs=[_full_spec(a.shape) for a in k1_in],
        out_specs=tuple(_full_spec(s.shape) for s in k1_out),
        out_shape=k1_out,
    )(*k1_in)

    # ---- kernel 2: doc + flow/node attention + flow update (3D batched einsums)
    def row3(p):  # (1, 2H) parameter row -> (1, 1, 2H)
        return p.astype(F32).reshape(1, 1, H2)

    k2_in = [
        enc_out_b, enc_node_b,
        encf.reshape(B, TK, H2), nodef.reshape(B, NK, H2),
        dfd.reshape(B, 1, H2), dff.reshape(B, 1, H2),
        jnp.broadcast_to(row3(params['vd']), (B, 1, H2)),
        jnp.broadcast_to(row3(params['vf']), (B, 1, H2)),
        row3(params['Wdc']), row3(params['Wff']),
        enc_padding_mask.astype(F32).reshape(B, 1, TK),
        enc_padding_mask_node.astype(F32).reshape(B, 1, NK),
        coverage.astype(F32).reshape(B, TK, 1),
        flow.astype(F32).reshape(B, NK, 1),
        node_to_token.astype(BF16),           # (B, NK, TK) original layout (no transpose)
        graph.astype(BF16),                   # (B, NK, NK) original layout (no transpose)
    ]
    k2_out = (
        jax.ShapeDtypeStruct((B, 1, H), F32),    # c_t_d
        jax.ShapeDtypeStruct((B, 1, H), F32),    # c_t_g
        jax.ShapeDtypeStruct((B, 1, H), F32),    # c_t_g2
        jax.ShapeDtypeStruct((B, 1, TK), F32),   # attn (lane-dense)
        jax.ShapeDtypeStruct((B, 1, TK), F32),   # attn node->token (lane-dense)
        jax.ShapeDtypeStruct((B, NK, 1), F32),   # flow_ (unnormalized)
    )
    ctd3, ctg3, ctg23, attn3, an2t3, flowu3 = pl.pallas_call(
        attention_kernel, grid=(1,),
        in_specs=[_full_spec(a.shape) for a in k2_in],
        out_specs=tuple(_full_spec(s.shape) for s in k2_out),
        out_shape=k2_out,
    )(*k2_in)

    c_t_d_n = ctd3.reshape(B, H)
    c_t_g_n = ctg3.reshape(B, H)
    c_t_g2_n = ctg23.reshape(B, H)
    attn_dist = attn3.reshape(B, TK)
    attn_n2t = an2t3.reshape(B, TK)
    coverage_next = coverage.astype(F32) + attn_dist                         # tiny, host
    flow_u = flowu3.reshape(B, NK)
    flow_next = flow_u / (jnp.sum(flow_u, axis=1, keepdims=True) + EPS)      # tiny, host

    # ---- kernel 3: p_gen + out1 + V-tiled logits + streaming softmax statistics
    Vt = 512 if (V > 512 and V % 512 == 0) else V  # TODO(synk): pad odd vocab sizes to a 128 multiple
    NV = V // Vt
    k3_const = [
        h_t, c_t, x, c_t_d_n, c_t_g_n, c_t_g2_n, attn_dist,
        params['Wp'].astype(BF16), params['bp'].astype(F32),
        params['Wo1'].astype(BF16), params['bo1'].astype(F32),
    ]
    k3_in = k3_const + [params['Wo2'].astype(BF16), params['bo2'].astype(F32)]
    k3_in_specs = ([_full_spec(a.shape) for a in k3_const]
                   + [pl.BlockSpec((H, Vt), lambda v: (0, v)),
                      pl.BlockSpec((1, Vt), lambda v: (0, v))])
    k3_out = (
        jax.ShapeDtypeStruct((B, 1), F32),    # p_gen
        jax.ShapeDtypeStruct((B, TK), F32),   # (1 - p_gen) * attn
        jax.ShapeDtypeStruct((B, H), F32),    # out1 hidden
        jax.ShapeDtypeStruct((B, 1), F32),    # running max
        jax.ShapeDtypeStruct((B, 1), F32),    # running sum-exp
        jax.ShapeDtypeStruct((B, V), F32),    # logits
    )
    k3_out_specs = (
        _full_spec((B, 1)), _full_spec((B, TK)), _full_spec((B, H)),
        _full_spec((B, 1)), _full_spec((B, 1)),
        pl.BlockSpec((B, Vt), lambda v: (0, v)),
    )
    pgen, attn_w, h1, m_stat, l_stat, logits = pl.pallas_call(
        head_stats_kernel, grid=(NV,),
        in_specs=k3_in_specs, out_specs=k3_out_specs, out_shape=k3_out,
        compiler_params=pltpu.CompilerParams(dimension_semantics=("arbitrary",)),
    )(*k3_in)

    # ---- kernel 4: final_dist = p_gen*softmax(logits) + scatter  (V-tiled, parallel)
    k4_in = [
        logits.reshape(B, 1, V), m_stat.reshape(B, 1, 1), l_stat.reshape(B, 1, 1),
        pgen.reshape(B, 1, 1), attn_w.reshape(B, 1, TK),
        voc_d.astype(jnp.int32).reshape(B, TK, 1),
    ]
    k4_in_specs = [
        pl.BlockSpec((B, 1, Vt), lambda v: (0, 0, v)),
        _full_spec((B, 1, 1)), _full_spec((B, 1, 1)), _full_spec((B, 1, 1)),
        _full_spec((B, 1, TK)), _full_spec((B, TK, 1)),
    ]
    final3 = pl.pallas_call(
        head_final_kernel, grid=(NV,),
        in_specs=k4_in_specs,
        out_specs=pl.BlockSpec((B, 1, Vt), lambda v: (0, 0, v)),
        out_shape=jax.ShapeDtypeStruct((B, 1, V), F32),
        compiler_params=pltpu.CompilerParams(dimension_semantics=("parallel",)),
    )(*k4_in)
    final_dist = final3.reshape(B, V)

    s_t = (h_t.reshape(1, B, H), c_t.reshape(1, B, H))
    return (final_dist, s_t, c_t_d_n, c_t_g_n, c_t_g2_n,
            attn_dist, attn_n2t, pgen, coverage_next, flow_next)


# ------------------------------------------------------------------- params
def init_params(key, H, E, V):
    keys = iter(jax.random.split(key, 24))

    def w(shape, scale=0.08):
        return jax.random.normal(next(keys), shape, jnp.float32) * scale

    H2, H4 = 2 * H, 4 * H
    p = {}
    p['emb'] = w((V, E))                                        # shared embedding table
    p['Wx'] = w((3 * H + E, E)); p['bx'] = w((1, E))            # x_context
    p['Wih'] = w((E, H4)); p['Whh'] = w((H, H4)); p['bl'] = w((1, H4))   # LSTM cell
    p['Wdh'] = w((H, H2)); p['Wds'] = w((H2, H2)); p['bds'] = w((1, H2))
    p['Wdc'] = w((1, H2)); p['vd'] = w((1, H2))                 # Doc_Attention
    p['Wfh'] = w((H, H2)); p['Wfs'] = w((H2, H2)); p['bfs'] = w((1, H2))
    p['Wff'] = w((1, H2)); p['vf'] = w((1, H2))                 # Flow_Attention
    p['Wp'] = w((5 * H + E, 1)); p['bp'] = w((1, 1))            # p_gen_linear
    p['Wo1'] = w((H4, H)); p['bo1'] = w((1, H))                 # out1
    p['Wo2'] = w((H, V)); p['bo2'] = w((1, V))                  # out2
    # TODO(synk): d_gra_linear exists in __init__ but its use is commented out in forward(); omitted.
    return p


# --------------------------------------------------------------------- main
if __name__ == "__main__":
    B, H, E, TK, NK, V = 2, 32, 32, 16, 8, 64   # emb_dim == hidden_dim (required by x_context dims)

    key = jax.random.PRNGKey(0)
    pkey, dkey = jax.random.split(key)
    params = init_params(pkey, H, E, V)
    ks = jax.random.split(dkey, 16)

    y_t_1 = jax.random.randint(ks[0], (B,), 0, V)
    h0 = jax.random.normal(ks[1], (1, B, H), jnp.float32) * 0.1
    c0 = jax.random.normal(ks[2], (1, B, H), jnp.float32) * 0.1
    enc_out = jax.random.normal(ks[3], (B, TK, H), jnp.float32) * 0.5
    enc_node = jax.random.normal(ks[4], (B, NK, H), jnp.float32) * 0.5
    enc_mask = jnp.ones((B, TK), jnp.float32).at[1, TK - 3:].set(0.0)
    enc_mask_node = jnp.ones((B, NK), jnp.float32).at[1, NK - 2:].set(0.0)
    c_t_d0 = jax.random.normal(ks[5], (B, H), jnp.float32) * 0.1
    c_t_g0 = jax.random.normal(ks[6], (B, H), jnp.float32) * 0.1
    c_t_g2_0 = jax.random.normal(ks[7], (B, H), jnp.float32) * 0.1
    coverage0 = jnp.zeros((B, TK), jnp.float32)
    flow0 = jax.random.uniform(ks[8], (B, NK), jnp.float32) + 0.1
    flow0 = flow0 / flow0.sum(axis=1, keepdims=True)
    n2t = (jax.random.uniform(ks[9], (B, NK, TK)) > 0.5).astype(jnp.float32)
    n2t = jnp.maximum(n2t, jax.nn.one_hot(jnp.arange(NK) % TK, TK)[None])   # each node hits >=1 token
    graph = (jax.random.uniform(ks[10], (B, NK, NK)) > 0.5).astype(jnp.float32)
    graph = jnp.maximum(graph, jnp.eye(NK, dtype=jnp.float32)[None])        # self loops
    voc_d = jax.random.randint(ks[11], (B, TK), 0, V)

    outs = decoder_step(params, y_t_1, (h0, c0), enc_out, enc_node,
                        enc_mask, enc_mask_node, c_t_d0, c_t_g0, c_t_g2_0,
                        coverage0, flow0, n2t, graph, voc_d, step=0)
    outs = jax.block_until_ready(outs)

    final_dist = outs[0]
    assert final_dist.shape == (B, V)
    assert bool(jnp.all(jnp.isfinite(final_dist)))
    sums = jnp.sum(final_dist, axis=1)
    assert bool(jnp.all(jnp.abs(sums - 1.0) < 5e-2)), sums
    print("KERNEL_OK")
</pallas_src>

<mosaic_0001>
module attributes {stable_mosaic.version = 11 : i64} {
  func.func @core_kernel(%arg0: i32, %arg1: memref<2x32xf32, #tpu.memory_space<vmem>>, %arg2: memref<2x32xf32, #tpu.memory_space<vmem>>, %arg3: memref<2x32xf32, #tpu.memory_space<vmem>>, %arg4: memref<2x32xf32, #tpu.memory_space<vmem>>, %arg5: memref<2x32xf32, #tpu.memory_space<vmem>>, %arg6: memref<2x32xf32, #tpu.memory_space<vmem>>, %arg7: memref<32x32xbf16, #tpu.memory_space<vmem>>, %arg8: memref<16x32xbf16, #tpu.memory_space<vmem>>, %arg9: memref<128x32xbf16, #tpu.memory_space<vmem>>, %arg10: memref<1x32xf32, #tpu.memory_space<vmem>>, %arg11: memref<32x128xbf16, #tpu.memory_space<vmem>>, %arg12: memref<32x128xbf16, #tpu.memory_space<vmem>>, %arg13: memref<1x128xf32, #tpu.memory_space<vmem>>, %arg14: memref<64x64xbf16, #tpu.memory_space<vmem>>, %arg15: memref<1x64xf32, #tpu.memory_space<vmem>>, %arg16: memref<64x64xbf16, #tpu.memory_space<vmem>>, %arg17: memref<1x64xf32, #tpu.memory_space<vmem>>, %arg18: memref<32x64xbf16, #tpu.memory_space<vmem>>, %arg19: memref<32x64xbf16, #tpu.memory_space<vmem>>, %arg20: memref<2x32xf32, #tpu.memory_space<vmem>>, %arg21: memref<2x32xf32, #tpu.memory_space<vmem>>, %arg22: memref<2x32xf32, #tpu.memory_space<vmem>>, %arg23: memref<2x64xf32, #tpu.memory_space<vmem>>, %arg24: memref<2x64xf32, #tpu.memory_space<vmem>>, %arg25: memref<32x64xf32, #tpu.memory_space<vmem>>, %arg26: memref<16x64xf32, #tpu.memory_space<vmem>>) attributes {dimension_semantics = [#tpu.dimension_semantics<arbitrary>], iteration_bounds = array<i64: 1>, scalar_prefetch = 0 : i64, scratch_operands = 0 : i64, tpu.core_type = #tpu.core_type<tc>, window_params = [{pipeline_mode = #tpu.pipeline_mode<synchronous>, transform_indices = @transform_0, window_bounds = array<i64: 2, 32>}, {pipeline_mode = #tpu.pipeline_mode<synchronous>, transform_indices = @transform_1, window_bounds = array<i64: 2, 32>}, {pipeline_mode = #tpu.pipeline_mode<synchronous>, transform_indices = @transform_2, window_bounds = array<i64: 2, 32>}, {pipeline_mode = #tpu.pipeline_mode<synchronous>, transform_indices = @transform_3, window_bounds = array<i64: 2, 32>}, {pipeline_mode = #tpu.pipeline_mode<synchronous>, transform_indices = @transform_4, window_bounds = array<i64: 2, 32>}, {pipeline_mode = #tpu.pipeline_mode<synchronous>, transform_indices = @transform_5, window_bounds = array<i64: 2, 32>}, {pipeline_mode = #tpu.pipeline_mode<synchronous>, transform_indices = @transform_6, window_bounds = array<i64: 32, 32>}, {pipeline_mode = #tpu.pipeline_mode<synchronous>, transform_indices = @transform_7, window_bounds = array<i64: 16, 32>}, {pipeline_mode = #tpu.pipeline_mode<synchronous>, transform_indices = @transform_8, window_bounds = array<i64: 128, 32>}, {pipeline_mode = #tpu.pipeline_mode<synchronous>, transform_indices = @transform_9, window_bounds = array<i64: 1, 32>}, {pipeline_mode = #tpu.pipeline_mode<synchronous>, transform_indices = @transform_10, window_bounds = array<i64: 32, 128>}, {pipeline_mode = #tpu.pipeline_mode<synchronous>, transform_indices = @transform_11, window_bounds = array<i64: 32, 128>}, {pipeline_mode = #tpu.pipeline_mode<synchronous>, transform_indices = @transform_12, window_bounds = array<i64: 1, 128>}, {pipeline_mode = #tpu.pipeline_mode<synchronous>, transform_indices = @transform_13, window_bounds = array<i64: 64, 64>}, {pipeline_mode = #tpu.pipeline_mode<synchronous>, transform_indices = @transform_14, window_bounds = array<i64: 1, 64>}, {pipeline_mode = #tpu.pipeline_mode<synchronous>, transform_indices = @transform_15, window_bounds = array<i64: 64, 64>}, {pipeline_mode = #tpu.pipeline_mode<synchronous>, transform_indices = @transform_16, window_bounds = array<i64: 1, 64>}, {pipeline_mode = #tpu.pipeline_mode<synchronous>, transform_indices = @transform_17, window_bounds = array<i64: 32, 64>}, {pipeline_mode = #tpu.pipeline_mode<synchronous>, transform_indices = @transform_18, window_bounds = array<i64: 32, 64>}, {pipeline_mode = #tpu.pipeline_mode<synchronous>, transform_indices = @transform_19, window_bounds = array<i64: 2, 32>}, {pipeline_mode = #tpu.pipeline_mode<synchronous>, transform_indices = @transform_20, window_bounds = array<i64: 2, 32>}, {pipeline_mode = #tpu.pipeline_mode<synchronous>, transform_indices = @transform_21, window_bounds = array<i64: 2, 32>}, {pipeline_mode = #tpu.pipeline_mode<synchronous>, transform_indices = @transform_22, window_bounds = array<i64: 2, 64>}, {pipeline_mode = #tpu.pipeline_mode<synchronous>, transform_indices = @transform_23, window_bounds = array<i64: 2, 64>}, {pipeline_mode = #tpu.pipeline_mode<synchronous>, transform_indices = @transform_24, window_bounds = array<i64: 32, 64>}, {pipeline_mode = #tpu.pipeline_mode<synchronous>, transform_indices = @transform_25, window_bounds = array<i64: 16, 64>}]} {
    %c0 = arith.constant 0 : index
    %c0_0 = arith.constant 0 : index
    %0 = vector.load %arg4[%c0, %c0_0] : memref<2x32xf32, #tpu.memory_space<vmem>>, vector<2x32xf32>
    %c0_1 = arith.constant 0 : index
    %c0_2 = arith.constant 0 : index
    %1 = vector.load %arg9[%c0_1, %c0_2] : memref<128x32xbf16, #tpu.memory_space<vmem>>, vector<32x32xbf16>
    %2 = arith.truncf %0 : vector<2x32xf32> to vector<2x32xbf16>
    %cst = arith.constant dense<0.000000e+00> : vector<2x32xf32>
    %3 = tpu.matmul %2, %1, %cst {dimension_numbers = #tpu.dot_dimension_numbers<[1], [0], [0], [1], [0, 0, 1, 1], [], []>} : vector<2x32xbf16>, vector<32x32xbf16>, vector<2x32xf32> -> vector<2x32xf32>
    %c0_3 = arith.constant 0 : index
    %c0_4 = arith.constant 0 : index
    %4 = vector.load %arg5[%c0_3, %c0_4] : memref<2x32xf32, #tpu.memory_space<vmem>>, vector<2x32xf32>
    %c32 = arith.constant 32 : index
    %c0_5 = arith.constant 0 : index
    %5 = vector.load %arg9[%c32, %c0_5] : memref<128x32xbf16, #tpu.memory_space<vmem>>, vector<32x32xbf16>
    %6 = arith.truncf %4 : vector<2x32xf32> to vector<2x32xbf16>
    %cst_6 = arith.constant dense<0.000000e+00> : vector<2x32xf32>
    %7 = tpu.matmul %6, %5, %cst_6 {dimension_numbers = #tpu.dot_dimension_numbers<[1], [0], [0], [1], [0, 0, 1, 1], [], []>} : vector<2x32xbf16>, vector<32x32xbf16>, vector<2x32xf32> -> vector<2x32xf32>
    %8 = arith.addf %3, %7 : vector<2x32xf32>
    %c0_7 = arith.constant 0 : index
    %c0_8 = arith.constant 0 : index
    %9 = vector.load %arg6[%c0_7, %c0_8] : memref<2x32xf32, #tpu.memory_space<vmem>>, vector<2x32xf32>
    %c64 = arith.constant 64 : index
    %c0_9 = arith.constant 0 : index
    %10 = vector.load %arg9[%c64, %c0_9] : memref<128x32xbf16, #tpu.memory_space<vmem>>, vector<32x32xbf16>
    %11 = arith.truncf %9 : vector<2x32xf32> to vector<2x32xbf16>
    %cst_10 = arith.constant dense<0.000000e+00> : vector<2x32xf32>
    %12 = tpu.matmul %11, %10, %cst_10 {dimension_numbers = #tpu.dot_dimension_numbers<[1], [0], [0], [1], [0, 0, 1, 1], [], []>} : vector<2x32xbf16>, vector<32x32xbf16>, vector<2x32xf32> -> vector<2x32xf32>
    %13 = arith.addf %8, %12 : vector<2x32xf32>
    %c0_11 = arith.constant 0 : index
    %c0_12 = arith.constant 0 : index
    %14 = vector.load %arg1[%c0_11, %c0_12] : memref<2x32xf32, #tpu.memory_space<vmem>>, vector<2x32xf32>
    %c96 = arith.constant 96 : index
    %c0_13 = arith.constant 0 : index
    %15 = vector.load %arg9[%c96, %c0_13] : memref<128x32xbf16, #tpu.memory_space<vmem>>, vector<32x32xbf16>
    %16 = arith.truncf %14 : vector<2x32xf32> to vector<2x32xbf16>
    %cst_14 = arith.constant dense<0.000000e+00> : vector<2x32xf32>
    %17 = tpu.matmul %16, %15, %cst_14 {dimension_numbers = #tpu.dot_dimension_numbers<[1], [0], [0], [1], [0, 0, 1, 1], [], []>} : vector<2x32xbf16>, vector<32x32xbf16>, vector<2x32xf32> -> vector<2x32xf32>
    %18 = arith.addf %13, %17 : vector<2x32xf32>
    %c0_15 = arith.constant 0 : index
    %c0_16 = arith.constant 0 : index
    %19 = vector.load %arg10[%c0_15, %c0_16] : memref<1x32xf32, #tpu.memory_space<vmem>>, vector<1x32xf32>
    %20 = vector.broadcast %19 : vector<1x32xf32> to vector<2x32xf32>
    %21 = arith.addf %18, %20 : vector<2x32xf32>
    %c0_17 = arith.constant 0 : index
    %c0_18 = arith.constant 0 : index
    %22 = vector.load %arg11[%c0_17, %c0_18] : memref<32x128xbf16, #tpu.memory_space<vmem>>, vector<32x128xbf16>
    %23 = arith.truncf %21 : vector<2x32xf32> to vector<2x32xbf16>
    %cst_19 = arith.constant dense<0.000000e+00> : vector<2x128xf32>
    %24 = tpu.matmul %23, %22, %cst_19 {dimension_numbers = #tpu.dot_dimension_numbers<[1], [0], [0], [1], [0, 0, 1, 1], [], []>} : vector<2x32xbf16>, vector<32x128xbf16>, vector<2x128xf32> -> vector<2x128xf32>
    %c0_20 = arith.constant 0 : index
    %c0_21 = arith.constant 0 : index
    %25 = vector.load %arg2[%c0_20, %c0_21] : memref<2x32xf32, #tpu.memory_space<vmem>>, vector<2x32xf32>
    %c0_22 = arith.constant 0 : index
    %c0_23 = arith.constant 0 : index
    %26 = vector.load %arg12[%c0_22, %c0_23] : memref<32x128xbf16, #tpu.memory_space<vmem>>, vector<32x128xbf16>
    %27 = arith.truncf %25 : vector<2x32xf32> to vector<2x32xbf16>
    %cst_24 = arith.constant dense<0.000000e+00> : vector<2x128xf32>
    %28 = tpu.matmul %27, %26, %cst_24 {dimension_numbers = #tpu.dot_dimension_numbers<[1], [0], [0], [1], [0, 0, 1, 1], [], []>} : vector<2x32xbf16>, vector<32x128xbf16>, vector<2x128xf32> -> vector<2x128xf32>
    %29 = arith.addf %24, %28 : vector<2x128xf32>
    %c0_25 = arith.constant 0 : index
    %c0_26 = arith.constant 0 : index
    %30 = vector.load %arg13[%c0_25, %c0_26] : memref<1x128xf32, #tpu.memory_space<vmem>>, vector<1x128xf32>
    %31 = vector.broadcast %30 : vector<1x128xf32> to vector<2x128xf32>
    %32 = arith.addf %29, %31 : vector<2x128xf32>
    %33 = vector.extract_strided_slice %32 {offsets = [0, 0], sizes = [2, 32], strides = [1, 1]} : vector<2x128xf32> to vector<2x32xf32>
    %34 = arith.negf %33 : vector<2x32xf32>
    %35 = math.exp %34 : vector<2x32xf32>
    %cst_27 = arith.constant 1.000000e+00 : f32
    %36 = vector.broadcast %cst_27 : f32 to vector<2x32xf32>
    %37 = arith.addf %36, %35 : vector<2x32xf32>
    %38 = arith.divf %36, %37 : vector<2x32xf32>
    %39 = vector.extract_strided_slice %32 {offsets = [0, 32], sizes = [2, 32], strides = [1, 1]} : vector<2x128xf32> to vector<2x32xf32>
    %40 = arith.negf %39 : vector<2x32xf32>
    %41 = math.exp %40 : vector<2x32xf32>
    %cst_28 = arith.constant 1.000000e+00 : f32
    %42 = vector.broadcast %cst_28 : f32 to vector<2x32xf32>
    %43 = arith.addf %42, %41 : vector<2x32xf32>
    %44 = arith.divf %42, %43 : vector<2x32xf32>
    %45 = vector.extract_strided_slice %32 {offsets = [0, 64], sizes = [2, 32], strides = [1, 1]} : vector<2x128xf32> to vector<2x32xf32>
    %46 = math.tanh %45 : vector<2x32xf32>
    %47 = vector.extract_strided_slice %32 {offsets = [0, 96], sizes = [2, 32], strides = [1, 1]} : vector<2x128xf32> to vector<2x32xf32>
    %48 = arith.negf %47 : vector<2x32xf32>
    %49 = math.exp %48 : vector<2x32xf32>
    %cst_29 = arith.constant 1.000000e+00 : f32
    %50 = vector.broadcast %cst_29 : f32 to vector<2x32xf32>
    %51 = arith.addf %50, %49 : vector<2x32xf32>
    %52 = arith.divf %50, %51 : vector<2x32xf32>
    %c0_30 = arith.constant 0 : index
    %c0_31 = arith.constant 0 : index
    %53 = vector.load %arg3[%c0_30, %c0_31] : memref<2x32xf32, #tpu.memory_space<vmem>>, vector<2x32xf32>
    %54 = arith.mulf %44, %53 : vector<2x32xf32>
    %55 = arith.mulf %38, %46 : vector<2x32xf32>
    %56 = arith.addf %54, %55 : vector<2x32xf32>
    %57 = math.tanh %56 : vector<2x32xf32>
    %58 = arith.mulf %52, %57 : vector<2x32xf32>
    %c0_32 = arith.constant 0 : index
    %c0_33 = arith.constant 0 : index
    %59 = vector.load %arg20[%c0_32, %c0_33] : memref<2x32xf32, #tpu.memory_space<vmem>>, vector<2x32xf32>
    tpu.vector_store %arg20[%c0_32, %c0_33], %21 {strides = array<i32>} : memref<2x32xf32, #tpu.memory_space<vmem>>, vector<2x32xf32>,
    %c0_34 = arith.constant 0 : index
    %c0_35 = arith.constant 0 : index
    %60 = vector.load %arg21[%c0_34, %c0_35] : memref<2x32xf32, #tpu.memory_space<vmem>>, vector<2x32xf32>
    tpu.vector_store %arg21[%c0_34, %c0_35], %58 {strides = array<i32>} : memref<2x32xf32, #tpu.memory_space<vmem>>, vector<2x32xf32>,
    %c0_36 = arith.constant 0 : index
    %c0_37 = arith.constant 0 : index
    %61 = vector.load %arg22[%c0_36, %c0_37] : memref<2x32xf32, #tpu.memory_space<vmem>>, vector<2x32xf32>
    tpu.vector_store %arg22[%c0_36, %c0_37], %56 {strides = array<i32>} : memref<2x32xf32, #tpu.memory_space<vmem>>, vector<2x32xf32>,
    %c0_38 = arith.constant 0 : index
    %c0_39 = arith.constant 0 : index
    %62 = vector.load %arg14[%c0_38, %c0_39] : memref<64x64xbf16, #tpu.memory_space<vmem>>, vector<32x64xbf16>
    %63 = arith.truncf %58 : vector<2x32xf32> to vector<2x32xbf16>
    %cst_40 = arith.constant dense<0.000000e+00> : vector<2x64xf32>
    %64 = tpu.matmul %63, %62, %cst_40 {dimension_numbers = #tpu.dot_dimension_numbers<[1], [0], [0], [1], [0, 0, 1, 1], [], []>} : vector<2x32xbf16>, vector<32x64xbf16>, vector<2x64xf32> -> vector<2x64xf32>
    %c32_41 = arith.constant 32 : index
    %c0_42 = arith.constant 0 : index
    %65 = vector.load %arg14[%c32_41, %c0_42] : memref<64x64xbf16, #tpu.memory_space<vmem>>, vector<32x64xbf16>
    %66 = arith.truncf %56 : vector<2x32xf32> to vector<2x32xbf16>
    %cst_43 = arith.constant dense<0.000000e+00> : vector<2x64xf32>
    %67 = tpu.matmul %66, %65, %cst_43 {dimension_numbers = #tpu.dot_dimension_numbers<[1], [0], [0], [1], [0, 0, 1, 1], [], []>} : vector<2x32xbf16>, vector<32x64xbf16>, vector<2x64xf32> -> vector<2x64xf32>
    %68 = arith.addf %64, %67 : vector<2x64xf32>
    %c0_44 = arith.constant 0 : index
    %c0_45 = arith.constant 0 : index
    %69 = vector.load %arg15[%c0_44, %c0_45] : memref<1x64xf32, #tpu.memory_space<vmem>>, vector<1x64xf32>
    %70 = vector.broadcast %69 : vector<1x64xf32> to vector<2x64xf32>
    %71 = arith.addf %68, %70 : vector<2x64xf32>
    %c0_46 = arith.constant 0 : index
    %c0_47 = arith.constant 0 : index
    %72 = vector.load %arg23[%c0_46, %c0_47] : memref<2x64xf32, #tpu.memory_space<vmem>>, vector<2x64xf32>
    tpu.vector_store %arg23[%c0_46, %c0_47], %71 {strides = array<i32>} : memref<2x64xf32, #tpu.memory_space<vmem>>, vector<2x64xf32>,
    %c0_48 = arith.constant 0 : index
    %c0_49 = arith.constant 0 : index
    %73 = vector.load %arg16[%c0_48, %c0_49] : memref<64x64xbf16, #tpu.memory_space<vmem>>, vector<32x64xbf16>
    %74 = arith.truncf %58 : vector<2x32xf32> to vector<2x32xbf16>
    %cst_50 = arith.constant dense<0.000000e+00> : vector<2x64xf32>
    %75 = tpu.matmul %74, %73, %cst_50 {dimension_numbers = #tpu.dot_dimension_numbers<[1], [0], [0], [1], [0, 0, 1, 1], [], []>} : vector<2x32xbf16>, vector<32x64xbf16>, vector<2x64xf32> -> vector<2x64xf32>
    %c32_51 = arith.constant 32 : index
    %c0_52 = arith.constant 0 : index
    %76 = vector.load %arg16[%c32_51, %c0_52] : memref<64x64xbf16, #tpu.memory_space<vmem>>, vector<32x64xbf16>
    %77 = arith.truncf %56 : vector<2x32xf32> to vector<2x32xbf16>
    %cst_53 = arith.constant dense<0.000000e+00> : vector<2x64xf32>
    %78 = tpu.matmul %77, %76, %cst_53 {dimension_numbers = #tpu.dot_dimension_numbers<[1], [0], [0], [1], [0, 0, 1, 1], [], []>} : vector<2x32xbf16>, vector<32x64xbf16>, vector<2x64xf32> -> vector<2x64xf32>
    %79 = arith.addf %75, %78 : vector<2x64xf32>
    %c0_54 = arith.constant 0 : index
    %c0_55 = arith.constant 0 : index
    %80 = vector.load %arg17[%c0_54, %c0_55] : memref<1x64xf32, #tpu.memory_space<vmem>>, vector<1x64xf32>
    %81 = vector.broadcast %80 : vector<1x64xf32> to vector<2x64xf32>
    %82 = arith.addf %79, %81 : vector<2x64xf32>
    %c0_56 = arith.constant 0 : index
    %c0_57 = arith.constant 0 : index
    %83 = vector.load %arg24[%c0_56, %c0_57] : memref<2x64xf32, #tpu.memory_space<vmem>>, vector<2x64xf32>
    tpu.vector_store %arg24[%c0_56, %c0_57], %82 {strides = array<i32>} : memref<2x64xf32, #tpu.memory_space<vmem>>, vector<2x64xf32>,
    %c0_58 = arith.constant 0 : index
    %c0_59 = arith.constant 0 : index
    %84 = vector.load %arg7[%c0_58, %c0_59] : memref<32x32xbf16, #tpu.memory_space<vmem>>, vector<32x32xbf16>
    %c0_60 = arith.constant 0 : index
    %c0_61 = arith.constant 0 : index
    %85 = vector.load %arg18[%c0_60, %c0_61] : memref<32x64xbf16, #tpu.memory_space<vmem>>, vector<32x64xbf16>
    %cst_62 = arith.constant dense<0.000000e+00> : vector<32x64xf32>
    %86 = tpu.matmul %84, %85, %cst_62 {dimension_numbers = #tpu.dot_dimension_numbers<[1], [0], [0], [1], [0, 0, 1, 1], [], []>} : vector<32x32xbf16>, vector<32x64xbf16>, vector<32x64xf32> -> vector<32x64xf32>
    %c0_63 = arith.constant 0 : index
    %c0_64 = arith.constant 0 : index
    %87 = vector.load %arg25[%c0_63, %c0_64] : memref<32x64xf32, #tpu.memory_space<vmem>>, vector<32x64xf32>
    tpu.vector_store %arg25[%c0_63, %c0_64], %86 {strides = array<i32>} : memref<32x64xf32, #tpu.memory_space<vmem>>, vector<32x64xf32>,
    %c0_65 = arith.constant 0 : index
    %c0_66 = arith.constant 0 : index
    %88 = vector.load %arg8[%c0_65, %c0_66] : memref<16x32xbf16, #tpu.memory_space<vmem>>, vector<16x32xbf16>
    %c0_67 = arith.constant 0 : index
    %c0_68 = arith.constant 0 : index
    %89 = vector.load %arg19[%c0_67, %c0_68] : memref<32x64xbf16, #tpu.memory_space<vmem>>, vector<32x64xbf16>
    %cst_69 = arith.constant dense<0.000000e+00> : vector<16x64xf32>
    %90 = tpu.matmul %88, %89, %cst_69 {dimension_numbers = #tpu.dot_dimension_numbers<[1], [0], [0], [1], [0, 0, 1, 1], [], []>} : vector<16x32xbf16>, vector<32x64xbf16>, vector<16x64xf32> -> vector<16x64xf32>
    %c0_70 = arith.constant 0 : index
    %c0_71 = arith.constant 0 : index
    %91 = vector.load %arg26[%c0_70, %c0_71] : memref<16x64xf32, #tpu.memory_space<vmem>>, vector<16x64xf32>
    tpu.vector_store %arg26[%c0_70, %c0_71], %90 {strides = array<i32>} : memref<16x64xf32, #tpu.memory_space<vmem>>, vector<16x64xf32>,
    return
  }
  func.func @transform_0(%arg0: i32) -> (i32, i32) {
    %c0_i32 = arith.constant 0 : i32
    %c0_i32_0 = arith.constant 0 : i32
    %c0_i32_1 = arith.constant 0 : i32
    return %c0_i32, %c0_i32_0 : i32, i32
  }
  func.func @transform_1(%arg0: i32) -> (i32, i32) {
    %c0_i32 = arith.constant 0 : i32
    %c0_i32_0 = arith.constant 0 : i32
    %c0_i32_1 = arith.constant 0 : i32
    return %c0_i32, %c0_i32_0 : i32, i32
  }
  func.func @transform_2(%arg0: i32) -> (i32, i32) {
    %c0_i32 = arith.constant 0 : i32
    %c0_i32_0 = arith.constant 0 : i32
    %c0_i32_1 = arith.constant 0 : i32
    return %c0_i32, %c0_i32_0 : i32, i32
  }
  func.func @transform_3(%arg0: i32) -> (i32, i32) {
    %c0_i32 = arith.constant 0 : i32
    %c0_i32_0 = arith.constant 0 : i32
    %c0_i32_1 = arith.constant 0 : i32
    return %c0_i32, %c0_i32_0 : i32, i32
  }
  func.func @transform_4(%arg0: i32) -> (i32, i32) {
    %c0_i32 = arith.constant 0 : i32
    %c0_i32_0 = arith.constant 0 : i32
    %c0_i32_1 = arith.constant 0 : i32
    return %c0_i32, %c0_i32_0 : i32, i32
  }
  func.func @transform_5(%arg0: i32) -> (i32, i32) {
    %c0_i32 = arith.constant 0 : i32
    %c0_i32_0 = arith.constant 0 : i32
    %c0_i32_1 = arith.constant 0 : i32
    return %c0_i32, %c0_i32_0 : i32, i32
  }
  func.func @transform_6(%arg0: i32) -> (i32, i32) {
    %c0_i32 = arith.constant 0 : i32
    %c0_i32_0 = arith.constant 0 : i32
    %c0_i32_1 = arith.constant 0 : i32
    return %c0_i32, %c0_i32_0 : i32, i32
  }
  func.func @transform_7(%arg0: i32) -> (i32, i32) {
    %c0_i32 = arith.constant 0 : i32
    %c0_i32_0 = arith.constant 0 : i32
    %c0_i32_1 = arith.constant 0 : i32
    return %c0_i32, %c0_i32_0 : i32, i32
  }
  func.func @transform_8(%arg0: i32) -> (i32, i32) {
    %c0_i32 = arith.constant 0 : i32
    %c0_i32_0 = arith.constant 0 : i32
    %c0_i32_1 = arith.constant 0 : i32
    return %c0_i32, %c0_i32_0 : i32, i32
  }
  func.func @transform_9(%arg0: i32) -> (i32, i32) {
    %c0_i32 = arith.constant 0 : i32
    %c0_i32_0 = arith.constant 0 : i32
    %c0_i32_1 = arith.constant 0 : i32
    return %c0_i32, %c0_i32_0 : i32, i32
  }
  func.func @transform_10(%arg0: i32) -> (i32, i32) {
    %c0_i32 = arith.constant 0 : i32
    %c0_i32_0 = arith.constant 0 : i32
    %c0_i32_1 = arith.constant 0 : i32
    return %c0_i32, %c0_i32_0 : i32, i32
  }
  func.func @transform_11(%arg0: i32) -> (i32, i32) {
    %c0_i32 = arith.constant 0 : i32
    %c0_i32_0 = arith.constant 0 : i32
    %c0_i32_1 = arith.constant 0 : i32
    return %c0_i32, %c0_i32_0 : i32, i32
  }
  func.func @transform_12(%arg0: i32) -> (i32, i32) {
    %c0_i32 = arith.constant 0 : i32
    %c0_i32_0 = arith.constant 0 : i32
    %c0_i32_1 = arith.constant 0 : i32
    return %c0_i32, %c0_i32_0 : i32, i32
  }
  func.func @transform_13(%arg0: i32) -> (i32, i32) {
    %c0_i32 = arith.constant 0 : i32
    %c0_i32_0 = arith.constant 0 : i32
    %c0_i32_1 = arith.constant 0 : i32
    return %c0_i32, %c0_i32_0 : i32, i32
  }
  func.func @transform_14(%arg0: i32) -> (i32, i32) {
    %c0_i32 = arith.constant 0 : i32
    %c0_i32_0 = arith.constant 0 : i32
    %c0_i32_1 = arith.constant 0 : i32
    return %c0_i32, %c0_i32_0 : i32, i32
  }
  func.func @transform_15(%arg0: i32) -> (i32, i32) {
    %c0_i32 = arith.constant 0 : i32
    %c0_i32_0 = arith.constant 0 : i32
    %c0_i32_1 = arith.constant 0 : i32
    return %c0_i32, %c0_i32_0 : i32, i32
  }
  func.func @transform_16(%arg0: i32) -> (i32, i32) {
    %c0_i32 = arith.constant 0 : i32
    %c0_i32_0 = arith.constant 0 : i32
    %c0_i32_1 = arith.constant 0 : i32
    return %c0_i32, %c0_i32_0 : i32, i32
  }
  func.func @transform_17(%arg0: i32) -> (i32, i32) {
    %c0_i32 = arith.constant 0 : i32
    %c0_i32_0 = arith.constant 0 : i32
    %c0_i32_1 = arith.constant 0 : i32
    return %c0_i32, %c0_i32_0 : i32, i32
  }
  func.func @transform_18(%arg0: i32) -> (i32, i32) {
    %c0_i32 = arith.constant 0 : i32
    %c0_i32_0 = arith.constant 0 : i32
    %c0_i32_1 = arith.constant 0 : i32
    return %c0_i32, %c0_i32_0 : i32, i32
  }
  func.func @transform_19(%arg0: i32) -> (i32, i32) {
    %c0_i32 = arith.constant 0 : i32
    %c0_i32_0 = arith.constant 0 : i32
    %c0_i32_1 = arith.constant 0 : i32
    return %c0_i32, %c0_i32_0 : i32, i32
  }
  func.func @transform_20(%arg0: i32) -> (i32, i32) {
    %c0_i32 = arith.constant 0 : i32
    %c0_i32_0 = arith.constant 0 : i32
    %c0_i32_1 = arith.constant 0 : i32
    return %c0_i32, %c0_i32_0 : i32, i32
  }
  func.func @transform_21(%arg0: i32) -> (i32, i32) {
    %c0_i32 = arith.constant 0 : i32
    %c0_i32_0 = arith.constant 0 : i32
    %c0_i32_1 = arith.constant 0 : i32
    return %c0_i32, %c0_i32_0 : i32, i32
  }
  func.func @transform_22(%arg0: i32) -> (i32, i32) {
    %c0_i32 = arith.constant 0 : i32
    %c0_i32_0 = arith.constant 0 : i32
    %c0_i32_1 = arith.constant 0 : i32
    return %c0_i32, %c0_i32_0 : i32, i32
  }
  func.func @transform_23(%arg0: i32) -> (i32, i32) {
    %c0_i32 = arith.constant 0 : i32
    %c0_i32_0 = arith.constant 0 : i32
    %c0_i32_1 = arith.constant 0 : i32
    return %c0_i32, %c0_i32_0 : i32, i32
  }
  func.func @transform_24(%arg0: i32) -> (i32, i32) {
    %c0_i32 = arith.constant 0 : i32
    %c0_i32_0 = arith.constant 0 : i32
    %c0_i32_1 = arith.constant 0 : i32
    return %c0_i32, %c0_i32_0 : i32, i32
  }
  func.func @transform_25(%arg0: i32) -> (i32, i32) {
    %c0_i32 = arith.constant 0 : i32
    %c0_i32_0 = arith.constant 0 : i32
    %c0_i32_1 = arith.constant 0 : i32
    return %c0_i32, %c0_i32_0 : i32, i32
  }
}

</mosaic_0001>

<llo_original>
// kernel: tpu_custom_call.1
$region0: #{tpu_custom_call.1}
  #allocation0 [shape = 'u32[]', space=smem, size = 0x4, offset = 0x4, fixed_abs, tag = 'smem constant byte address 0x4 - core index']
  #allocation1 [shape = 'u32[72,128]{1,0:T(1,128)}', space=vmem, size = 0x9000, scoped, tag = 'internal scratch']
  %s0 = inlined_call_operand.hbm [shape: f32[2,32], index: 0, kind: input, shape index: {}]
  %s1 = inlined_call_operand.hbm [shape: f32[2,32], index: 1, kind: input, shape index: {}]
  %s2 = inlined_call_operand.hbm [shape: f32[2,32], index: 2, kind: input, shape index: {}]
  %s3 = inlined_call_operand.hbm [shape: f32[2,32], index: 3, kind: input, shape index: {}]
  %s4 = inlined_call_operand.hbm [shape: f32[2,32], index: 4, kind: input, shape index: {}]
  %s5 = inlined_call_operand.hbm [shape: f32[2,32], index: 5, kind: input, shape index: {}]
  %s6 = inlined_call_operand.vmem [shape: bf16[32,32], index: 6, kind: input, shape index: {}]
  %s7 = inlined_call_operand.hbm [shape: bf16[16,32], index: 7, kind: input, shape index: {}]
  %s8 = inlined_call_operand.vmem [shape: bf16[128,32], index: 8, kind: input, shape index: {}]
  %s9 = inlined_call_operand.vmem [shape: f32[1,32], index: 9, kind: input, shape index: {}]
  %s10 = inlined_call_operand.hbm [shape: bf16[32,128], index: 10, kind: input, shape index: {}]
  %s11 = inlined_call_operand.hbm [shape: bf16[32,128], index: 11, kind: input, shape index: {}]
  %s12 = inlined_call_operand.hbm [shape: f32[1,128], index: 12, kind: input, shape index: {}]
  %s13 = inlined_call_operand.vmem [shape: bf16[64,64], index: 13, kind: input, shape index: {}]
  %s14 = inlined_call_operand.hbm [shape: f32[1,64], index: 14, kind: input, shape index: {}]
  %s15 = inlined_call_operand.vmem [shape: bf16[64,64], index: 15, kind: input, shape index: {}]
  %s16 = inlined_call_operand.hbm [shape: f32[1,64], index: 16, kind: input, shape index: {}]
  %s17 = inlined_call_operand.hbm [shape: bf16[32,64], index: 17, kind: input, shape index: {}]
  %s18 = inlined_call_operand.vmem [shape: bf16[32,64], index: 18, kind: input, shape index: {}]
  %s19 = inlined_call_operand.hbm [shape: f32[2,32], index: 19, kind: output, shape index: {0}]
  %s20 = inlined_call_operand.hbm [shape: f32[2,32], index: 20, kind: output, shape index: {1}]
  %s21 = inlined_call_operand.hbm [shape: f32[2,32], index: 21, kind: output, shape index: {2}]
  %s22 = inlined_call_operand.hbm [shape: f32[2,64], index: 22, kind: output, shape index: {3}]
  %s23 = inlined_call_operand.hbm [shape: f32[2,64], index: 23, kind: output, shape index: {4}]
  %s24 = inlined_call_operand.hbm [shape: f32[32,64], index: 24, kind: output, shape index: {5}]
  %s25 = inlined_call_operand.hbm [shape: f32[16,64], index: 25, kind: output, shape index: {6}]
  %26 = xla_tuple %s19, %s20, %s21, %s22, %s23, %s24, %s25
  %s27 = sld [smem:[#allocation0]]
  $region186: #{tpu_custom_call.1} parent=0
    _
  %s29 = ssub.s32 1, %s27
  %s30 = scalar_select 0, %s29, %s27
  $region1: #{tpu_custom_call.1} parent=0
    #allocation2 [shape = 'u8[1024]{0}', space=vmem, size = 0x400, scoped, tag = 'input window, operand 0, single buffered']
    #allocation3 [shape = 's32[1]{0}', space=sflag, size = 0x4, scoped, tag = 'scoped memory for tpu_custom_call.1']
    #allocation4 [shape = 's32[1]{0}', space=sflag, size = 0x4, scoped, tag = 'scoped memory for tpu_custom_call.1']
    #allocation5 [shape = 'u8[1024]{0}', space=vmem, size = 0x400, scoped, tag = 'input window, operand 1, single buffered']
    #allocation6 [shape = 's32[1]{0}', space=sflag, size = 0x4, scoped, tag = 'scoped memory for tpu_custom_call.1']
    #allocation7 [shape = 'u8[1024]{0}', space=vmem, size = 0x400, scoped, tag = 'input window, operand 2, single buffered']
    #allocation8 [shape = 'u8[1024]{0}', space=vmem, size = 0x400, scoped, tag = 'input window, operand 3, single buffered']
    #allocation9 [shape = 's32[1]{0}', space=sflag, size = 0x4, scoped, tag = 'scoped memory for tpu_custom_call.1']
    #allocation10 [shape = 'u8[1024]{0}', space=vmem, size = 0x400, scoped, tag = 'input window, operand 4, single buffered']
    #allocation11 [shape = 'u8[1024]{0}', space=vmem, size = 0x400, scoped, tag = 'input window, operand 5, single buffered']
    #allocation12 [shape = 's32[1]{0}', space=sflag, size = 0x4, scoped, tag = 'scoped memory for tpu_custom_call.1']
    #allocation13 [shape = 'u8[4096]{0}', space=vmem, size = 0x1000, scoped, tag = 'input window, operand 7, single buffered']
    #allocation14 [shape = 'u8[8192]{0}', space=vmem, size = 0x2000, scoped, tag = 'input window, operand 10, single buffered']
    #allocation15 [shape = 's32[1]{0}', space=sflag, size = 0x4, scoped, tag = 'scoped memory for tpu_custom_call.1']
    #allocation16 [shape = 'u8[8192]{0}', space=vmem, size = 0x2000, scoped, tag = 'input window, operand 11, single buffered']
    #allocation17 [shape = 'u8[512]{0}', space=vmem, size = 0x400, scoped, tag = 'input window, operand 12, single buffered']
    #allocation18 [shape = 's32[1]{0}', space=sflag, size = 0x4, scoped, tag = 'scoped memory for tpu_custom_call.1']
    #allocation19 [shape = 'u8[512]{0}', space=vmem, size = 0x400, scoped, tag = 'input window, operand 14, single buffered']
    #allocation20 [shape = 'u8[512]{0}', space=vmem, size = 0x400, scoped, tag = 'input window, operand 16, single buffered']
    #allocation21 [shape = 's32[1]{0}', space=sflag, size = 0x4, scoped, tag = 'scoped memory for tpu_custom_call.1']
    #allocation22 [shape = 'u8[8192]{0}', space=vmem, size = 0x2000, scoped, tag = 'input window, operand 17, single buffered']
    #allocation23 [shape = 'u8[1024]{0}', space=vmem, size = 0x400, scoped, tag = 'output window, operand 0, single buffered']
    #allocation24 [shape = 'u8[1024]{0}', space=vmem, size = 0x400, scoped, tag = 'output window, operand 1, single buffered']
    #allocation25 [shape = 's32[1]{0}', space=sflag, size = 0x4, scoped, tag = 'scoped memory for tpu_custom_call.1']
    #allocation26 [shape = 'u8[1024]{0}', space=vmem, size = 0x400, scoped, tag = 'output window, operand 2, single buffered']
    #allocation27 [shape = 'u8[1024]{0}', space=vmem, size = 0x400, scoped, tag = 'output window, operand 3, single buffered']
    #allocation28 [shape = 's32[1]{0}', space=sflag, size = 0x4, scoped, tag = 'scoped memory for tpu_custom_call.1']
    #allocation29 [shape = 'u8[1024]{0}', space=vmem, size = 0x400, scoped, tag = 'output window, operand 4, single buffered']
    #allocation30 [shape = 'u8[16384]{0}', space=vmem, size = 0x4000, scoped, tag = 'output window, operand 5, single buffered']
    #allocation31 [shape = 's32[1]{0}', space=sflag, size = 0x4, scoped, tag = 'scoped memory for tpu_custom_call.1']
    #allocation32 [shape = 'u8[8192]{0}', space=vmem, size = 0x2000, scoped, tag = 'output window, operand 6, single buffered']
    %31 = vsyncpa [#allocation3], 0
    %32 = vsyncpa [#allocation6], 0
    %33 = vsyncpa [#allocation9], 0
    %34 = vsyncpa [#allocation12], 0
    %35 = vsyncpa [#allocation15], 0
    %36 = vsyncpa [#allocation18], 0
    %37 = vsyncpa [#allocation21], 0
    %38 = vsyncpa [#allocation4], 0
    %39 = vsyncpa [#allocation25], 0
    %40 = vsyncpa [#allocation28], 0
    %41 = vsyncpa [#allocation31], 0
    // Predicated region
    $region2: #{tpu_custom_call.1} parent=1 // pred_check
      _
    $region3: #{tpu_custom_call.1} parent=1 // pred_check_branch
      %43 = sbr.rel (0) target = $region5
    $region4: #{tpu_custom_call.1} parent=1 // pred_region
      %45 = vsyncadd [#allocation3], 0
      %s47 = sshll.u32 %s0, 4
      %s48 = int_to_ptr.hbm [resolvable:$true] %s47
      %s49 = sshll.u32 [#allocation2], 4
      %s50 = int_to_ptr.vmem [resolvable:$true] %s49
      %52 = dma.hbm_to_vmem [thread:$0]  %s48, 32, %s50, [#allocation3]
    $region5: #{tpu_custom_call.1} parent=1 // pred_fallthru
      _
    // Predicated region
    $region6: #{tpu_custom_call.1} parent=1 // pred_check
      _
    $region7: #{tpu_custom_call.1} parent=1 // pred_check_branch
      %54 = sbr.rel (0) target = $region9
    $region8: #{tpu_custom_call.1} parent=1 // pred_region
      %56 = vsyncadd [#allocation6], 0
      %s58 = sshll.u32 %s1, 4
      %s59 = int_to_ptr.hbm [resolvable:$true] %s58
      %s60 = sshll.u32 [#allocation5], 4
      %s61 = int_to_ptr.vmem [resolvable:$true] %s60
      %63 = dma.hbm_to_vmem [thread:$0]  %s59, 32, %s61, [#allocation6]
    $region9: #{tpu_custom_call.1} parent=1 // pred_fallthru
      _
    // Predicated region
    $region10: #{tpu_custom_call.1} parent=1 // pred_check
      _
    $region11: #{tpu_custom_call.1} parent=1 // pred_check_branch
      %65 = sbr.rel (0) target = $region13
    $region12: #{tpu_custom_call.1} parent=1 // pred_region
      %67 = vsyncadd [#allocation6], 0
      %s69 = sshll.u32 %s2, 4
      %s70 = int_to_ptr.hbm [resolvable:$true] %s69
      %s71 = sshll.u32 [#allocation7], 4
      %s72 = int_to_ptr.vmem [resolvable:$true] %s71
      %74 = dma.hbm_to_vmem [thread:$0]  %s70, 32, %s72, [#allocation6]
    $region13: #{tpu_custom_call.1} parent=1 // pred_fallthru
      _
    // Predicated region
    $region14: #{tpu_custom_call.1} parent=1 // pred_check
      _
    $region15: #{tpu_custom_call.1} parent=1 // pred_check_branch
      %76 = sbr.rel (0) target = $region17
    $region16: #{tpu_custom_call.1} parent=1 // pred_region
      %78 = vsyncadd [#allocation9], 0
      %s80 = sshll.u32 %s3, 4
      %s81 = int_to_ptr.hbm [resolvable:$true] %s80
      %s82 = sshll.u32 [#allocation8], 4
      %s83 = int_to_ptr.vmem [resolvable:$true] %s82
      %85 = dma.hbm_to_vmem [thread:$0]  %s81, 32, %s83, [#allocation9]
    $region17: #{tpu_custom_call.1} parent=1 // pred_fallthru
      _
    // Predicated region
    $region18: #{tpu_custom_call.1} parent=1 // pred_check
      _
    $region19: #{tpu_custom_call.1} parent=1 // pred_check_branch
      %87 = sbr.rel (0) target = $region21
    $region20: #{tpu_custom_call.1} parent=1 // pred_region
      %89 = vsyncadd [#allocation9], 0
      %s91 = sshll.u32 %s4, 4
      %s92 = int_to_ptr.hbm [resolvable:$true] %s91
      %s93 = sshll.u32 [#allocation10], 4
      %s94 = int_to_ptr.vmem [resolvable:$true] %s93
      %96 = dma.hbm_to_vmem [thread:$0]  %s92, 32, %s94, [#allocation9]
    $region21: #{tpu_custom_call.1} parent=1 // pred_fallthru
      _
    // Predicated region
    $region22: #{tpu_custom_call.1} parent=1 // pred_check
      _
    $region23: #{tpu_custom_call.1} parent=1 // pred_check_branch
      %98 = sbr.rel (0) target = $region25
    $region24: #{tpu_custom_call.1} parent=1 // pred_region
      %100 = vsyncadd [#allocation12], 0
      %s102 = sshll.u32 %s5, 4
      %s103 = int_to_ptr.hbm [resolvable:$true] %s102
      %s104 = sshll.u32 [#allocation11], 4
      %s105 = int_to_ptr.vmem [resolvable:$true] %s104
      %107 = dma.hbm_to_vmem [thread:$0]  %s103, 32, %s105, [#allocation12]
    $region25: #{tpu_custom_call.1} parent=1 // pred_fallthru
      _
    // Predicated region
    $region26: #{tpu_custom_call.1} parent=1 // pred_check
      _
    $region27: #{tpu_custom_call.1} parent=1 // pred_check_branch
      %109 = sbr.rel (0) target = $region29
    $region28: #{tpu_custom_call.1} parent=1 // pred_region
      _
    $region29: #{tpu_custom_call.1} parent=1 // pred_fallthru
      _
    // Predicated region
    $region30: #{tpu_custom_call.1} parent=1 // pred_check
      _
    $region31: #{tpu_custom_call.1} parent=1 // pred_check_branch
      %111 = sbr.rel (0) target = $region33
    $region32: #{tpu_custom_call.1} parent=1 // pred_region
      %113 = vsyncadd [#allocation12], 0
      %s114 = sshll.u32 %s7, 4
      %s115 = int_to_ptr.hbm [resolvable:$true] %s114
      %s116 = sshll.u32 [#allocation13], 4
      %s117 = int_to_ptr.vmem [resolvable:$true] %s116
      %122 = dma.hbm_to_vmem [thread:$0]  %s115, 128, %s117, [#allocation12], 64, 64, 4
    $region33: #{tpu_custom_call.1} parent=1 // pred_fallthru
      _
    // Predicated region
    $region34: #{tpu_custom_call.1} parent=1 // pred_check
      _
    $region35: #{tpu_custom_call.1} parent=1 // pred_check_branch
      %124 = sbr.rel (0) target = $region37
    $region36: #{tpu_custom_call.1} parent=1 // pred_region
      _
    $region37: #{tpu_custom_call.1} parent=1 // pred_fallthru
      _
    // Predicated region
    $region38: #{tpu_custom_call.1} parent=1 // pred_check
      _
    $region39: #{tpu_custom_call.1} parent=1 // pred_check_branch
      %126 = sbr.rel (0) target = $region41
    $region40: #{tpu_custom_call.1} parent=1 // pred_region
      _
    $region41: #{tpu_custom_call.1} parent=1 // pred_fallthru
      _
    // Predicated region
    $region42: #{tpu_custom_call.1} parent=1 // pred_check
      _
    $region43: #{tpu_custom_call.1} parent=1 // pred_check_branch
      %128 = sbr.rel (0) target = $region45
    $region44: #{tpu_custom_call.1} parent=1 // pred_region
      %130 = vsyncadd [#allocation15], 0
      %s131 = sshll.u32 %s10, 4
      %s132 = int_to_ptr.hbm [resolvable:$true] %s131
      %s133 = sshll.u32 [#allocation14], 4
      %s134 = int_to_ptr.vmem [resolvable:$true] %s133
      %139 = dma.hbm_to_vmem [thread:$0]  %s132, 256, %s134, [#allocation15], 64, 64, 4
    $region45: #{tpu_custom_call.1} parent=1 // pred_fallthru
      _
    // Predicated region
    $region46: #{tpu_custom_call.1} parent=1 // pred_check
      _
    $region47: #{tpu_custom_call.1} parent=1 // pred_check_branch
      %141 = sbr.rel (0) target = $region49
    $region48: #{tpu_custom_call.1} parent=1 // pred_region
      %143 = vsyncadd [#allocation15], 0
      %s144 = sshll.u32 %s11, 4
      %s145 = int_to_ptr.hbm [resolvable:$true] %s144
      %s146 = sshll.u32 [#allocation16], 4
      %s147 = int_to_ptr.vmem [resolvable:$true] %s146
      %152 = dma.hbm_to_vmem [thread:$0]  %s145, 256, %s147, [#allocation15], 64, 64, 4
    $region49: #{tpu_custom_call.1} parent=1 // pred_fallthru
      _
    // Predicated region
    $region50: #{tpu_custom_call.1} parent=1 // pred_check
      _
    $region51: #{tpu_custom_call.1} parent=1 // pred_check_branch
      %154 = sbr.rel (0) target = $region53
    $region52: #{tpu_custom_call.1} parent=1 // pred_region
      %156 = vsyncadd [#allocation18], 0
      %s158 = sshll.u32 %s12, 4
      %s159 = int_to_ptr.hbm [resolvable:$true] %s158
      %s160 = sshll.u32 [#allocation17], 4
      %s161 = int_to_ptr.vmem [resolvable:$true] %s160
      %163 = dma.hbm_to_vmem [thread:$0]  %s159, 16, %s161, [#allocation18]
    $region53: #{tpu_custom_call.1} parent=1 // pred_fallthru
      _
    // Predicated region
    $region54: #{tpu_custom_call.1} parent=1 // pred_check
      _
    $region55: #{tpu_custom_call.1} parent=1 // pred_check_branch
      %165 = sbr.rel (0) target = $region57
    $region56: #{tpu_custom_call.1} parent=1 // pred_region
      _
    $region57: #{tpu_custom_call.1} parent=1 // pred_fallthru
      _
    // Predicated region
    $region58: #{tpu_custom_call.1} parent=1 // pred_check
      _
    $region59: #{tpu_custom_call.1} parent=1 // pred_check_branch
      %167 = sbr.rel (0) target = $region61
    $region60: #{tpu_custom_call.1} parent=1 // pred_region
      %169 = vsyncadd [#allocation18], 0
      %s171 = sshll.u32 %s14, 4
      %s172 = int_to_ptr.hbm [resolvable:$true] %s171
      %s173 = sshll.u32 [#allocation19], 4
      %s174 = int_to_ptr.vmem [resolvable:$true] %s173
      %176 = dma.hbm_to_vmem [thread:$0]  %s172, 16, %s174, [#allocation18]
    $region61: #{tpu_custom_call.1} parent=1 // pred_fallthru
      _
    // Predicated region
    $region62: #{tpu_custom_call.1} parent=1 // pred_check
      _
    $region63: #{tpu_custom_call.1} parent=1 // pred_check_branch
      %178 = sbr.rel (0) target = $region65
    $region64: #{tpu_custom_call.1} parent=1 // pred_region
      _
    $region65: #{tpu_custom_call.1} parent=1 // pred_fallthru
      _
    // Predicated region
    $region66: #{tpu_custom_call.1} parent=1 // pred_check
      _
    $region67: #{tpu_custom_call.1} parent=1 // pred_check_branch
      %180 = sbr.rel (0) target = $region69
    $region68: #{tpu_custom_call.1} parent=1 // pred_region
      %182 = vsyncadd [#allocation21], 0
      %s184 = sshll.u32 %s16, 4
      %s185 = int_to_ptr.hbm [resolvable:$true] %s184
      %s186 = sshll.u32 [#allocation20], 4
      %s187 = int_to_ptr.vmem [resolvable:$true] %s186
      %189 = dma.hbm_to_vmem [thread:$0]  %s185, 16, %s187, [#allocation21]
    $region69: #{tpu_custom_call.1} parent=1 // pred_fallthru
      _
    // Predicated region
    $region70: #{tpu_custom_call.1} parent=1 // pred_check
      _
    $region71: #{tpu_custom_call.1} parent=1 // pred_check_branch
      %191 = sbr.rel (0) target = $region73
    $region72: #{tpu_custom_call.1} parent=1 // pred_region
      %193 = vsyncadd [#allocation21], 0
      %s194 = sshll.u32 %s17, 4
      %s195 = int_to_ptr.hbm [resolvable:$true] %s194
      %s196 = sshll.u32 [#allocation22], 4
      %s197 = int_to_ptr.vmem [resolvable:$true] %s196
      %202 = dma.hbm_to_vmem [thread:$0]  %s195, 256, %s197, [#allocation21], 64, 64, 4
    $region73: #{tpu_custom_call.1} parent=1 // pred_fallthru
      _
    // Predicated region
    $region74: #{tpu_custom_call.1} parent=1 // pred_check
      _
    $region75: #{tpu_custom_call.1} parent=1 // pred_check_branch
      %204 = sbr.rel (0) target = $region77
    $region76: #{tpu_custom_call.1} parent=1 // pred_region
      _
    $region77: #{tpu_custom_call.1} parent=1 // pred_fallthru
      _
    // Predicated region
    $region78: #{tpu_custom_call.1} parent=1 // pred_check
      _
    $region79: #{tpu_custom_call.1} parent=1 // pred_check_branch
      %206 = sbr.rel (0) target = $region81
    $region80: #{tpu_custom_call.1} parent=1 // pred_region
      %208 = dma.done [#allocation3], 32
    $region81: #{tpu_custom_call.1} parent=1 // pred_fallthru
      _
    // Predicated region
    $region82: #{tpu_custom_call.1} parent=1 // pred_check
      _
    $region83: #{tpu_custom_call.1} parent=1 // pred_check_branch
      %210 = sbr.rel (0) target = $region85
    $region84: #{tpu_custom_call.1} parent=1 // pred_region
      %212 = dma.done [#allocation6], 32
    $region85: #{tpu_custom_call.1} parent=1 // pred_fallthru
      _
    // Predicated region
    $region86: #{tpu_custom_call.1} parent=1 // pred_check
      _
    $region87: #{tpu_custom_call.1} parent=1 // pred_check_branch
      %214 = sbr.rel (0) target = $region89
    $region88: #{tpu_custom_call.1} parent=1 // pred_region
      %216 = dma.done [#allocation6], 32
    $region89: #{tpu_custom_call.1} parent=1 // pred_fallthru
      _
    // Predicated region
    $region90: #{tpu_custom_call.1} parent=1 // pred_check
      _
    $region91: #{tpu_custom_call.1} parent=1 // pred_check_branch
      %218 = sbr.rel (0) target = $region93
    $region92: #{tpu_custom_call.1} parent=1 // pred_region
      %220 = dma.done [#allocation9], 32
    $region93: #{tpu_custom_call.1} parent=1 // pred_fallthru
      _
    // Predicated region
    $region94: #{tpu_custom_call.1} parent=1 // pred_check
      _
    $region95: #{tpu_custom_call.1} parent=1 // pred_check_branch
      %222 = sbr.rel (0) target = $region97
    $region96: #{tpu_custom_call.1} parent=1 // pred_region
      %224 = dma.done [#allocation9], 32
    $region97: #{tpu_custom_call.1} parent=1 // pred_fallthru
      _
    // Predicated region
    $region98: #{tpu_custom_call.1} parent=1 // pred_check
      _
    $region99: #{tpu_custom_call.1} parent=1 // pred_check_branch
      %226 = sbr.rel (0) target = $region101
    $region100: #{tpu_custom_call.1} parent=1 // pred_region
      %228 = dma.done [#allocation12], 32
    $region101: #{tpu_custom_call.1} parent=1 // pred_fallthru
      _
    // Predicated region
    $region102: #{tpu_custom_call.1} parent=1 // pred_check
      _
    $region103: #{tpu_custom_call.1} parent=1 // pred_check_branch
      %230 = sbr.rel (0) target = $region105
    $region104: #{tpu_custom_call.1} parent=1 // pred_region
      %232 = dma.done [#allocation12], 128
    $region105: #{tpu_custom_call.1} parent=1 // pred_fallthru
      _
    // Predicated region
    $region106: #{tpu_custom_call.1} parent=1 // pred_check
      _
    $region107: #{tpu_custom_call.1} parent=1 // pred_check_branch
      %234 = sbr.rel (0) target = $region109
    $region108: #{tpu_custom_call.1} parent=1 // pred_region
      %236 = dma.done [#allocation15], 256
    $region109: #{tpu_custom_call.1} parent=1 // pred_fallthru
      _
    // Predicated region
    $region110: #{tpu_custom_call.1} parent=1 // pred_check
      _
    $region111: #{tpu_custom_call.1} parent=1 // pred_check_branch
      %238 = sbr.rel (0) target = $region113
    $region112: #{tpu_custom_call.1} parent=1 // pred_region
      %240 = dma.done [#allocation15], 256
    $region113: #{tpu_custom_call.1} parent=1 // pred_fallthru
      _
    // Predicated region
    $region114: #{tpu_custom_call.1} parent=1 // pred_check
      _
    $region115: #{tpu_custom_call.1} parent=1 // pred_check_branch
      %242 = sbr.rel (0) target = $region117
    $region116: #{tpu_custom_call.1} parent=1 // pred_region
      %244 = dma.done [#allocation18], 16
    $region117: #{tpu_custom_call.1} parent=1 // pred_fallthru
      _
    // Predicated region
    $region118: #{tpu_custom_call.1} parent=1 // pred_check
      _
    $region119: #{tpu_custom_call.1} parent=1 // pred_check_branch
      %246 = sbr.rel (0) target = $region121
    $region120: #{tpu_custom_call.1} parent=1 // pred_region
      %248 = dma.done [#allocation18], 16
    $region121: #{tpu_custom_call.1} parent=1 // pred_fallthru
      _
    // Predicated region
    $region122: #{tpu_custom_call.1} parent=1 // pred_check
      _
    $region123: #{tpu_custom_call.1} parent=1 // pred_check_branch
      %250 = sbr.rel (0) target = $region125
    $region124: #{tpu_custom_call.1} parent=1 // pred_region
      %252 = dma.done [#allocation21], 16
    $region125: #{tpu_custom_call.1} parent=1 // pred_fallthru
      _
    // Predicated region
    $region126: #{tpu_custom_call.1} parent=1 // pred_check
      _
    $region127: #{tpu_custom_call.1} parent=1 // pred_check_branch
      %254 = sbr.rel (0) target = $region129
    $region128: #{tpu_custom_call.1} parent=1 // pred_region
      %256 = dma.done [#allocation21], 256
    $region129: #{tpu_custom_call.1} parent=1 // pred_fallthru
      _
    %v258 = vld [vmem:[#allocation8] sm:$0x3]
    %v259 = vld [vmem:[%s8] sm:$0xf]
    %v260 = vld [vmem:[%s8 + $0x4] sm:$0xf]
    %v261 = vld [vmem:[%s8 + $0x8] sm:$0xf]
    %v262 = vld [vmem:[%s8 + $0xc] sm:$0xf]
    %v263 = vpack.c.bf16 %v258, %v258
    %v264 = vld [vmem:[#allocation10] sm:$0x3]
    %v265 = vld [vmem:[%s8 + $0x10] sm:$0xf]
    %v266 = vld [vmem:[%s8 + $0x14] sm:$0xf]
    %v267 = vld [vmem:[%s8 + $0x18] sm:$0xf]
    %v268 = vld [vmem:[%s8 + $0x1c] sm:$0xf]
    %v269 = vpack.c.bf16 %v264, %v264
    %v274 = vunpack.c.l.b16 %v265
    %v275 = vunpack.c.l.b16 %v266
    %v276 = vunpack.c.l.b16 %v267
    %v277 = vunpack.c.l.b16 %v268
    %v278 = vpack.c.b16 %v275, %v274
    %v279 = vpack.c.b16 %v277, %v276
    %vm282 = vcmask 261120
    %v284 = vsel %vm282, %v269, 0
    %286 = vmatpush.bf16.msra.mxu0 0
    %287 = vmatpush.bf16.msra.mxu0 0
    %288 = vmatpush.bf16.msra.mxu0 0
    %289 = vmatpush.bf16.msra.mxu0 0
    %290 = vmatpush.bf16.msra.mxu0 0
    %291 = vmatpush.bf16.msra.mxu0 0
    %292 = vmatpush.bf16.msra.mxu0 %v279
    %293 = vmatpush.bf16.msra.mxu0 %v278
    %294 = vmatmul.bf16.gmra.mxu0 %v284
    %v295 = vpop.f32.mrf.mxu0
    %v296 = vadd.f32 0.0, %v295
    %v297 = vpop.f32.mrf.mxu0
    %298 = vdwg.mxu0
    %v303 = vunpack.c.l.b16 %v259
    %v304 = vunpack.c.l.b16 %v260
    %v305 = vunpack.c.l.b16 %v261
    %v306 = vunpack.c.l.b16 %v262
    %v307 = vpack.c.b16 %v304, %v303
    %v308 = vpack.c.b16 %v306, %v305
    %v312 = vsel %vm282, %v263, 0
    %314 = vmatpush.bf16.msra.mxu0 0
    %315 = vmatpush.bf16.msra.mxu0 0
    %316 = vmatpush.bf16.msra.mxu0 0
    %317 = vmatpush.bf16.msra.mxu0 0
    %318 = vmatpush.bf16.msra.mxu0 0
    %319 = vmatpush.bf16.msra.mxu0 0
    %320 = vmatpush.bf16.msra.mxu0 %v308
    %321 = vmatpush.bf16.msra.mxu0 %v307
    %322 = vmatmul.bf16.gmra.mxu0 %v312
    %v323 = vpop.f32.mrf.mxu0
    %v324 = vadd.f32 %v296, %v323
    %v325 = vpop.f32.mrf.mxu0
    %326 = vdwg.mxu0
    %v327 = vld [vmem:[#allocation11] sm:$0x3]
    %v328 = vld [vmem:[%s8 + $0x20] sm:$0xf]
    %v329 = vld [vmem:[%s8 + $0x24] sm:$0xf]
    %v330 = vld [vmem:[%s8 + $0x28] sm:$0xf]
    %v331 = vld [vmem:[%s8 + $0x2c] sm:$0xf]
    %v332 = vpack.c.bf16 %v327, %v327
    %v337 = vunpack.c.l.b16 %v328
    %v338 = vunpack.c.l.b16 %v329
    %v339 = vunpack.c.l.b16 %v330
    %v340 = vunpack.c.l.b16 %v331
    %v341 = vpack.c.b16 %v338, %v337
    %v342 = vpack.c.b16 %v340, %v339
    %v346 = vsel %vm282, %v332, 0
    %348 = vmatpush.bf16.msra.mxu0 0
    %349 = vmatpush.bf16.msra.mxu0 0
    %350 = vmatpush.bf16.msra.mxu0 0
    %351 = vmatpush.bf16.msra.mxu0 0
    %352 = vmatpush.bf16.msra.mxu0 0
    %353 = vmatpush.bf16.msra.mxu0 0
    %354 = vmatpush.bf16.msra.mxu0 %v342
    %355 = vmatpush.bf16.msra.mxu0 %v341
    %356 = vmatmul.bf16.gmra.mxu0 %v346
    %v357 = vpop.f32.mrf.mxu0
    %v358 = vadd.f32 0.0, %v357
    %v359 = vpop.f32.mrf.mxu0
    %360 = vdwg.mxu0
    %v361 = vadd.f32 %v324, %v358
    %v362 = vld [vmem:[#allocation2] sm:$0x3]
    %v363 = vld [vmem:[%s8 + $0x30] sm:$0xf]
    %v364 = vld [vmem:[%s8 + $0x34] sm:$0xf]
    %v365 = vld [vmem:[%s8 + $0x38] sm:$0xf]
    %v366 = vld [vmem:[%s8 + $0x3c] sm:$0xf]
    %v367 = vpack.c.bf16 %v362, %v362
    %v372 = vunpack.c.l.b16 %v363
    %v373 = vunpack.c.l.b16 %v364
    %v374 = vunpack.c.l.b16 %v365
    %v375 = vunpack.c.l.b16 %v366
    %v376 = vpack.c.b16 %v373, %v372
    %v377 = vpack.c.b16 %v375, %v374
    %v381 = vsel %vm282, %v367, 0
    %383 = vmatpush.bf16.msra.mxu0 0
    %384 = vmatpush.bf16.msra.mxu0 0
    %385 = vmatpush.bf16.msra.mxu0 0
    %386 = vmatpush.bf16.msra.mxu0 0
    %387 = vmatpush.bf16.msra.mxu0 0
    %388 = vmatpush.bf16.msra.mxu0 0
    %389 = vmatpush.bf16.msra.mxu0 %v377
    %390 = vmatpush.bf16.msra.mxu0 %v376
    %391 = vmatmul.bf16.gmra.mxu0 %v381
    %v392 = vpop.f32.mrf.mxu0
    %v393 = vadd.f32 0.0, %v392
    %v394 = vpop.f32.mrf.mxu0
    %395 = vdwg.mxu0
    %v396 = vadd.f32 %v361, %v393
    %v397 = vld [vmem:[%s9] sm:$0x1]
    %v399 = vperm.slane %v397, 0
    %v401 = vadd.f32 %v396, %v399
    %v402 = vld [vmem:[#allocation14] sm:$0xf]
    %v403 = vld [vmem:[#allocation14 + $0x4] sm:$0xf]
    %v404 = vld [vmem:[#allocation14 + $0x8] sm:$0xf]
    %v405 = vld [vmem:[#allocation14 + $0xc] sm:$0xf]
    %v406 = vpack.c.bf16 %v401, %v401
    %v407 = vld [vmem:[#allocation5] sm:$0x3]
    %v408 = vld [vmem:[#allocation16] sm:$0xf]
    %v409 = vld [vmem:[#allocation16 + $0x4] sm:$0xf]
    %v410 = vld [vmem:[#allocation16 + $0x8] sm:$0xf]
    %v411 = vld [vmem:[#allocation16 + $0xc] sm:$0xf]
    %v412 = vpack.c.bf16 %v407, %v407
    %v417 = vunpack.c.l.b16 %v408
    %v418 = vunpack.c.l.b16 %v409
    %v419 = vunpack.c.l.b16 %v410
    %v420 = vunpack.c.l.b16 %v411
    %v421 = vpack.c.b16 %v418, %v417
    %v422 = vpack.c.b16 %v420, %v419
    %v426 = vsel %vm282, %v412, 0
    %428 = vmatpush.bf16.msra.mxu0 0
    %429 = vmatpush.bf16.msra.mxu0 0
    %430 = vmatpush.bf16.msra.mxu0 0
    %431 = vmatpush.bf16.msra.mxu0 0
    %432 = vmatpush.bf16.msra.mxu0 0
    %433 = vmatpush.bf16.msra.mxu0 0
    %434 = vmatpush.bf16.msra.mxu0 %v422
    %435 = vmatpush.bf16.msra.mxu0 %v421
    %436 = vmatmul.bf16.gmra.mxu0 %v426
    %v437 = vpop.f32.mrf.mxu0
    %v438 = vadd.f32 0.0, %v437
    %v439 = vpop.f32.mrf.mxu0
    %440 = vdwg.mxu0
    %v445 = vunpack.c.l.b16 %v402
    %v446 = vunpack.c.l.b16 %v403
    %v447 = vunpack.c.l.b16 %v404
    %v448 = vunpack.c.l.b16 %v405
    %v449 = vpack.c.b16 %v446, %v445
    %v450 = vpack.c.b16 %v448, %v447
    %v454 = vsel %vm282, %v406, 0
    %456 = vmatpush.bf16.msra.mxu0 0
    %457 = vmatpush.bf16.msra.mxu0 0
    %458 = vmatpush.bf16.msra.mxu0 0
    %459 = vmatpush.bf16.msra.mxu0 0
    %460 = vmatpush.bf16.msra.mxu0 0
    %461 = vmatpush.bf16.msra.mxu0 0
    %462 = vmatpush.bf16.msra.mxu0 %v450
    %463 = vmatpush.bf16.msra.mxu0 %v449
    %464 = vmatmul.bf16.gmra.mxu0 %v454
    %v465 = vpop.f32.mrf.mxu0
    %v466 = vadd.f32 %v438, %v465
    %v467 = vpop.f32.mrf.mxu0
    %468 = vdwg.mxu0
    %v469 = vld [vmem:[#allocation17] sm:$0x1]
    %v471 = vperm.slane %v469, 0
    %v473 = vadd.f32 %v466, %v471
    %v474 = vxor.u32 %v473, 2147483648
    %v475 = vmul.f32 %v474, 1.442695
    %v476 = vpow.pop %v475
    %v477 = vadd.f32 %v476, 1.0
    %v478 = vrcp.pop %v477
    %v479 = vmul.f32 %v477, %v478
    %v480 = vsub.f32 1.0, %v479
    %v481 = vmul.f32 %v478, %v480
    %v482 = vadd.f32 %v478, %v481
    %vm483 = vweird.f32 %v477
    %vm484 = vweird.f32 %v478
    %vm485 = vmor %vm483, %vm484
    %v486 = vsel %vm485, %v478, %v482
    %v487 = vand.u32 2147483647, %v477
    %vm488 = vcmp.eq.f32.partialorder %v487, 8.507059e+37
    %v489 = vand.u32 %v477, 2147483648
    %v490 = vor.u32 1.1754944e-38, %v489
    %v491 = vsel %vm488, %v490, %v486
    %v492 = vmul.f32 1.0, %v491
    %v493 = vtanh.pop %v473
    %v494 = vld [vmem:[#allocation7] sm:$0x3]
    %496 = vrot.lane.b32.xlu0 %v494, 32
    %v497 = vpop.permute.xlu0 %496
    %v499 = vmul.f32 %v492, %v497
    %501 = vrot.lane.b32.xlu0 %v493, 64
    %v502 = vpop.permute.xlu0 %501
    %v504 = vmul.f32 %v492, %v502
    %506 = vrot.lane.b32.xlu0 %v504, 32
    %v507 = vpop.permute.xlu0 %506
    %v509 = vadd.f32 %v499, %v507
    %v510 = vtanh.pop %v509
    %512 = vrot.lane.b32.xlu0 %v510, 64
    %v513 = vpop.permute.xlu0 %512
    %v515 = vmul.f32 %v492, %v513
    %vm516 = vcmask 254976
    %517 = vst.msk [vmem:[#allocation23] sm:$0x3] %vm516, %v401
    %519 = vrot.lane.b32.xlu0 %v515, 32
    %v520 = vpop.permute.xlu0 %519
    %522 = vst.msk [vmem:[#allocation24] sm:$0x3] %vm516, %v520
    %524 = vrot.lane.b32.xlu0 %v509, 96
    %v525 = vpop.permute.xlu0 %524
    %527 = vst.msk [vmem:[#allocation26] sm:$0x3] %vm516, %v525
    %v528 = vld [vmem:[%s13] sm:$0xf]
    %v529 = vld [vmem:[%s13 + $0x4] sm:$0xf]
    %v530 = vld [vmem:[%s13 + $0x8] sm:$0xf]
    %v531 = vld [vmem:[%s13 + $0xc] sm:$0xf]
    %v532 = vpack.c.bf16 %v515, %v515
    %v533 = vld [vmem:[%s13 + $0x10] sm:$0xf]
    %v534 = vld [vmem:[%s13 + $0x14] sm:$0xf]
    %v535 = vld [vmem:[%s13 + $0x18] sm:$0xf]
    %v536 = vld [vmem:[%s13 + $0x1c] sm:$0xf]
    %v537 = vpack.c.bf16 %v509, %v509
    %539 = vrot.lane.b32.xlu0 %v537, 96
    %v540 = vpop.permute.xlu0 %539
    %v545 = vunpack.c.l.b16 %v533
    %v546 = vunpack.c.l.b16 %v534
    %v547 = vunpack.c.l.b16 %v535
    %v548 = vunpack.c.l.b16 %v536
    %v549 = vpack.c.b16 %v546, %v545
    %v550 = vpack.c.b16 %v548, %v547
    %v554 = vsel %vm282, %v540, 0
    %556 = vmatpush.bf16.msra.mxu0 0
    %557 = vmatpush.bf16.msra.mxu0 0
    %558 = vmatpush.bf16.msra.mxu0 0
    %559 = vmatpush.bf16.msra.mxu0 0
    %560 = vmatpush.bf16.msra.mxu0 0
    %561 = vmatpush.bf16.msra.mxu0 0
    %562 = vmatpush.bf16.msra.mxu0 %v550
    %563 = vmatpush.bf16.msra.mxu0 %v549
    %564 = vmatmul.bf16.gmra.mxu0 %v554
    %v565 = vpop.f32.mrf.mxu0
    %v566 = vadd.f32 0.0, %v565
    %v567 = vpop.f32.mrf.mxu0
    %568 = vdwg.mxu0
    %570 = vrot.lane.b32.xlu0 %v532, 32
    %v571 = vpop.permute.xlu0 %570
    %v576 = vunpack.c.l.b16 %v528
    %v577 = vunpack.c.l.b16 %v529
    %v578 = vunpack.c.l.b16 %v530
    %v579 = vunpack.c.l.b16 %v531
    %v580 = vpack.c.b16 %v577, %v576
    %v581 = vpack.c.b16 %v579, %v578
    %v585 = vsel %vm282, %v571, 0
    %587 = vmatpush.bf16.msra.mxu0 0
    %588 = vmatpush.bf16.msra.mxu0 0
    %589 = vmatpush.bf16.msra.mxu0 0
    %590 = vmatpush.bf16.msra.mxu0 0
    %591 = vmatpush.bf16.msra.mxu0 0
    %592 = vmatpush.bf16.msra.mxu0 0
    %593 = vmatpush.bf16.msra.mxu0 %v581
    %594 = vmatpush.bf16.msra.mxu0 %v580
    %595 = vmatmul.bf16.gmra.mxu0 %v585
    %v596 = vpop.f32.mrf.mxu0
    %v597 = vadd.f32 %v566, %v596
    %v598 = vpop.f32.mrf.mxu0
    %599 = vdwg.mxu0
    %v600 = vld [vmem:[#allocation19] sm:$0x1]
    %v602 = vperm.slane %v600, 0
    %v604 = vadd.f32 %v597, %v602
    %vm605 = vcmask 517120
    %606 = vst.msk [vmem:[#allocation27] sm:$0x3] %vm605, %v604
    %v607 = vld [vmem:[%s15] sm:$0xf]
    %v608 = vld [vmem:[%s15 + $0x4] sm:$0xf]
    %v609 = vld [vmem:[%s15 + $0x8] sm:$0xf]
    %v610 = vld [vmem:[%s15 + $0xc] sm:$0xf]
    %v611 = vld [vmem:[%s15 + $0x10] sm:$0xf]
    %v612 = vld [vmem:[%s15 + $0x14] sm:$0xf]
    %v613 = vld [vmem:[%s15 + $0x18] sm:$0xf]
    %v614 = vld [vmem:[%s15 + $0x1c] sm:$0xf]
    %v619 = vunpack.c.l.b16 %v611
    %v620 = vunpack.c.l.b16 %v612
    %v621 = vunpack.c.l.b16 %v613
    %v622 = vunpack.c.l.b16 %v614
    %v623 = vpack.c.b16 %v620, %v619
    %v624 = vpack.c.b16 %v622, %v621
    %627 = vmatpush.bf16.msra.mxu0 0
    %628 = vmatpush.bf16.msra.mxu0 0
    %629 = vmatpush.bf16.msra.mxu0 0
    %630 = vmatpush.bf16.msra.mxu0 0
    %631 = vmatpush.bf16.msra.mxu0 0
    %632 = vmatpush.bf16.msra.mxu0 0
    %633 = vmatpush.bf16.msra.mxu0 %v624
    %634 = vmatpush.bf16.msra.mxu0 %v623
    %635 = vmatmul.bf16.gmra.mxu0 %v554
    %v636 = vpop.f32.mrf.mxu0
    %v637 = vadd.f32 0.0, %v636
    %v638 = vpop.f32.mrf.mxu0
    %639 = vdwg.mxu0
    %v644 = vunpack.c.l.b16 %v607
    %v645 = vunpack.c.l.b16 %v608
    %v646 = vunpack.c.l.b16 %v609
    %v647 = vunpack.c.l.b16 %v610
    %v648 = vpack.c.b16 %v645, %v644
    %v649 = vpack.c.b16 %v647, %v646
    %652 = vmatpush.bf16.msra.mxu0 0
    %653 = vmatpush.bf16.msra.mxu0 0
    %654 = vmatpush.bf16.msra.mxu0 0
    %655 = vmatpush.bf16.msra.mxu0 0
    %656 = vmatpush.bf16.msra.mxu0 0
    %657 = vmatpush.bf16.msra.mxu0 0
    %658 = vmatpush.bf16.msra.mxu0 %v649
    %659 = vmatpush.bf16.msra.mxu0 %v648
    %660 = vmatmul.bf16.gmra.mxu0 %v585
    %v661 = vpop.f32.mrf.mxu0
    %v662 = vadd.f32 %v637, %v661
    %v663 = vpop.f32.mrf.mxu0
    %664 = vdwg.mxu0
    %v665 = vld [vmem:[#allocation20] sm:$0x1]
    %v667 = vperm.slane %v665, 0
    %v669 = vadd.f32 %v662, %v667
    %670 = vst.msk [vmem:[#allocation29] sm:$0x3] %vm605, %v669
    %v671 = vld [vmem:[%s6] sm:$0xf]
    %v672 = vld [vmem:[%s6 + $0x4] sm:$0xf]
    %v673 = vld [vmem:[%s6 + $0x8] sm:$0xf]
    %v674 = vld [vmem:[%s6 + $0xc] sm:$0xf]
    %v675 = vld [vmem:[#allocation22] sm:$0xf]
    %v676 = vld [vmem:[#allocation22 + $0x4] sm:$0xf]
    %v677 = vld [vmem:[#allocation22 + $0x8] sm:$0xf]
    %v678 = vld [vmem:[#allocation22 + $0xc] sm:$0xf]
    %v683 = vunpack.c.l.b16 %v671
    %v684 = vunpack.c.l.b16 %v672
    %v685 = vunpack.c.l.b16 %v673
    %v686 = vunpack.c.l.b16 %v674
    %v687 = vpack.c.b16 %v684, %v683
    %v688 = vpack.c.b16 %v686, %v685
    %v693 = vunpack.c.l.b16 %v675
    %v694 = vunpack.c.l.b16 %v676
    %v695 = vunpack.c.l.b16 %v677
    %v696 = vunpack.c.l.b16 %v678
    %v697 = vpack.c.b16 %v694, %v693
    %v698 = vpack.c.b16 %v696, %v695
    %v702 = vsel %vm282, %v687, 0
    %v705 = vsel %vm282, %v688, 0
    %707 = vmatpush.bf16.msra.mxu0 0
    %708 = vmatpush.bf16.msra.mxu0 0
    %709 = vmatpush.bf16.msra.mxu0 0
    %710 = vmatpush.bf16.msra.mxu0 0
    %711 = vmatpush.bf16.msra.mxu0 0
    %712 = vmatpush.bf16.msra.mxu0 0
    %713 = vmatpush.bf16.msra.mxu0 %v698
    %714 = vmatpush.bf16.msra.mxu0 %v697
    %715 = vmatmul.bf16.gmra.mxu0 %v702
    %v716 = vpop.f32.mrf.mxu0
    %v717 = vadd.f32 0.0, %v716
    %v718 = vpop.f32.mrf.mxu0
    %v719 = vadd.f32 0.0, %v718
    %720 = vmatmul.bf16.gmra.mxu0 %v705
    %v721 = vpop.f32.mrf.mxu0
    %v722 = vadd.f32 0.0, %v721
    %v723 = vpop.f32.mrf.mxu0
    %v724 = vadd.f32 0.0, %v723
    %725 = vdwg.mxu0
    %vm726 = vcmask 523264
    %727 = vst.msk [vmem:[#allocation30] sm:$0xff] %vm726, %v717
    %728 = vst.msk [vmem:[#allocation30 + $0x8] sm:$0xff] %vm726, %v719
    %729 = vst.msk [vmem:[#allocation30 + $0x10] sm:$0xff] %vm726, %v722
    %730 = vst.msk [vmem:[#allocation30 + $0x18] sm:$0xff] %vm726, %v724
    %v731 = vld [vmem:[#allocation13] sm:$0xf]
    %v732 = vld [vmem:[#allocation13 + $0x4] sm:$0xf]
    %v733 = vld [vmem:[%s18] sm:$0xf]
    %v734 = vld [vmem:[%s18 + $0x4] sm:$0xf]
    %v735 = vld [vmem:[%s18 + $0x8] sm:$0xf]
    %v736 = vld [vmem:[%s18 + $0xc] sm:$0xf]
    %v739 = vunpack.c.l.b16 %v731
    %v740 = vunpack.c.l.b16 %v732
    %v741 = vpack.c.b16 %v740, %v739
    %v746 = vunpack.c.l.b16 %v733
    %v747 = vunpack.c.l.b16 %v734
    %v748 = vunpack.c.l.b16 %v735
    %v749 = vunpack.c.l.b16 %v736
    %v750 = vpack.c.b16 %v747, %v746
    %v751 = vpack.c.b16 %v749, %v748
    %v755 = vsel %vm282, %v741, 0
    %757 = vmatpush.bf16.msra.mxu0 0
    %758 = vmatpush.bf16.msra.mxu0 0
    %759 = vmatpush.bf16.msra.mxu0 0
    %760 = vmatpush.bf16.msra.mxu0 0
    %761 = vmatpush.bf16.msra.mxu0 0
    %762 = vmatpush.bf16.msra.mxu0 0
    %763 = vmatpush.bf16.msra.mxu0 %v751
    %764 = vmatpush.bf16.msra.mxu0 %v750
    %765 = vmatmul.bf16.gmra.mxu0 %v755
    %v766 = vpop.f32.mrf.mxu0
    %v767 = vadd.f32 0.0, %v766
    %v768 = vpop.f32.mrf.mxu0
    %v769 = vadd.f32 0.0, %v768
    %770 = vdwg.mxu0
    %771 = vst.msk [vmem:[#allocation32] sm:$0xff] %vm726, %v767
    %772 = vst.msk [vmem:[#allocation32 + $0x8] sm:$0xff] %vm726, %v769
    // Predicated region
    $region130: #{tpu_custom_call.1} parent=1 // pred_check
      _
    $region131: #{tpu_custom_call.1} parent=1 // pred_check_branch
      %774 = sbr.rel (0) target = $region133
    $region132: #{tpu_custom_call.1} parent=1 // pred_region
      %776 = vsyncadd [#allocation4], 0
      %s778 = sshll.u32 [#allocation23], 4
      %s779 = int_to_ptr.vmem [resolvable:$true] %s778
      %s780 = sshll.u32 %s19, 4
      %s781 = int_to_ptr.hbm [resolvable:$true] %s780
      %783 = dma.vmem_to_hbm [thread:$0]  %s779, 32, %s781, [#allocation4]
    $region133: #{tpu_custom_call.1} parent=1 // pred_fallthru
      _
    // Predicated region
    $region134: #{tpu_custom_call.1} parent=1 // pred_check
      _
    $region135: #{tpu_custom_call.1} parent=1 // pred_check_branch
      %785 = sbr.rel (0) target = $region137
    $region136: #{tpu_custom_call.1} parent=1 // pred_region
      %787 = vsyncadd [#allocation25], 0
      %s789 = sshll.u32 [#allocation24], 4
      %s790 = int_to_ptr.vmem [resolvable:$true] %s789
      %s791 = sshll.u32 %s20, 4
      %s792 = int_to_ptr.hbm [resolvable:$true] %s791
      %794 = dma.vmem_to_hbm [thread:$0]  %s790, 32, %s792, [#allocation25]
    $region137: #{tpu_custom_call.1} parent=1 // pred_fallthru
      _
    // Predicated region
    $region138: #{tpu_custom_call.1} parent=1 // pred_check
      _
    $region139: #{tpu_custom_call.1} parent=1 // pred_check_branch
      %796 = sbr.rel (0) target = $region141
    $region140: #{tpu_custom_call.1} parent=1 // pred_region
      %798 = vsyncadd [#allocation25], 0
      %s800 = sshll.u32 [#allocation26], 4
      %s801 = int_to_ptr.vmem [resolvable:$true] %s800
      %s802 = sshll.u32 %s21, 4
      %s803 = int_to_ptr.hbm [resolvable:$true] %s802
      %805 = dma.vmem_to_hbm [thread:$0]  %s801, 32, %s803, [#allocation25]
    $region141: #{tpu_custom_call.1} parent=1 // pred_fallthru
      _
    // Predicated region
    $region142: #{tpu_custom_call.1} parent=1 // pred_check
      _
    $region143: #{tpu_custom_call.1} parent=1 // pred_check_branch
      %807 = sbr.rel (0) target = $region145
    $region144: #{tpu_custom_call.1} parent=1 // pred_region
      %809 = vsyncadd [#allocation28], 0
      %s811 = sshll.u32 [#allocation27], 4
      %s812 = int_to_ptr.vmem [resolvable:$true] %s811
      %s813 = sshll.u32 %s22, 4
      %s814 = int_to_ptr.hbm [resolvable:$true] %s813
      %816 = dma.vmem_to_hbm [thread:$0]  %s812, 32, %s814, [#allocation28]
    $region145: #{tpu_custom_call.1} parent=1 // pred_fallthru
      _
    // Predicated region
    $region146: #{tpu_custom_call.1} parent=1 // pred_check
      _
    $region147: #{tpu_custom_call.1} parent=1 // pred_check_branch
      %818 = sbr.rel (0) target = $region149
    $region148: #{tpu_custom_call.1} parent=1 // pred_region
      %820 = vsyncadd [#allocation28], 0
      %s822 = sshll.u32 [#allocation29], 4
      %s823 = int_to_ptr.vmem [resolvable:$true] %s822
      %s824 = sshll.u32 %s23, 4
      %s825 = int_to_ptr.hbm [resolvable:$true] %s824
      %827 = dma.vmem_to_hbm [thread:$0]  %s823, 32, %s825, [#allocation28]
    $region149: #{tpu_custom_call.1} parent=1 // pred_fallthru
      _
    // Predicated region
    $region150: #{tpu_custom_call.1} parent=1 // pred_check
      _
    $region151: #{tpu_custom_call.1} parent=1 // pred_check_branch
      %829 = sbr.rel (0) target = $region153
    $region152: #{tpu_custom_call.1} parent=1 // pred_region
      %831 = vsyncadd [#allocation31], 0
      %s832 = sshll.u32 [#allocation30], 4
      %s833 = int_to_ptr.vmem [resolvable:$true] %s832
      %s834 = sshll.u32 %s24, 4
      %s835 = int_to_ptr.hbm [resolvable:$true] %s834
      %840 = dma.vmem_to_hbm [thread:$0]  %s833, 512, %s835, [#allocation31], 128, 128, 8
    $region153: #{tpu_custom_call.1} parent=1 // pred_fallthru
      _
    // Predicated region
    $region154: #{tpu_custom_call.1} parent=1 // pred_check
      _
    $region155: #{tpu_custom_call.1} parent=1 // pred_check_branch
      %842 = sbr.rel (0) target = $region157
    $region156: #{tpu_custom_call.1} parent=1 // pred_region
      %844 = vsyncadd [#allocation31], 0
      %s845 = sshll.u32 [#allocation32], 4
      %s846 = int_to_ptr.vmem [resolvable:$true] %s845
      %s847 = sshll.u32 %s25, 4
      %s848 = int_to_ptr.hbm [resolvable:$true] %s847
      %853 = dma.vmem_to_hbm [thread:$0]  %s846, 256, %s848, [#allocation31], 128, 128, 8
    $region157: #{tpu_custom_call.1} parent=1 // pred_fallthru
      _
    // Predicated region
    $region158: #{tpu_custom_call.1} parent=1 // pred_check
      _
    $region159: #{tpu_custom_call.1} parent=1 // pred_check_branch
      %855 = sbr.rel (0) target = $region161
    $region160: #{tpu_custom_call.1} parent=1 // pred_region
      %857 = dma.done [#allocation4], 32
    $region161: #{tpu_custom_call.1} parent=1 // pred_fallthru
      _
    // Predicated region
    $region162: #{tpu_custom_call.1} parent=1 // pred_check
      _
    $region163: #{tpu_custom_call.1} parent=1 // pred_check_branch
      %859 = sbr.rel (0) target = $region165
    $region164: #{tpu_custom_call.1} parent=1 // pred_region
      %861 = dma.done [#allocation25], 32
    $region165: #{tpu_custom_call.1} parent=1 // pred_fallthru
      _
    // Predicated region
    $region166: #{tpu_custom_call.1} parent=1 // pred_check
      _
    $region167: #{tpu_custom_call.1} parent=1 // pred_check_branch
      %863 = sbr.rel (0) target = $region169
    $region168: #{tpu_custom_call.1} parent=1 // pred_region
      %865 = dma.done [#allocation25], 32
    $region169: #{tpu_custom_call.1} parent=1 // pred_fallthru
      _
    // Predicated region
    $region170: #{tpu_custom_call.1} parent=1 // pred_check
      _
    $region171: #{tpu_custom_call.1} parent=1 // pred_check_branch
      %867 = sbr.rel (0) target = $region173
    $region172: #{tpu_custom_call.1} parent=1 // pred_region
      %869 = dma.done [#allocation28], 32
    $region173: #{tpu_custom_call.1} parent=1 // pred_fallthru
      _
    // Predicated region
    $region174: #{tpu_custom_call.1} parent=1 // pred_check
      _
    $region175: #{tpu_custom_call.1} parent=1 // pred_check_branch
      %871 = sbr.rel (0) target = $region177
    $region176: #{tpu_custom_call.1} parent=1 // pred_region
      %873 = dma.done [#allocation28], 32
    $region177: #{tpu_custom_call.1} parent=1 // pred_fallthru
      _
    // Predicated region
    $region178: #{tpu_custom_call.1} parent=1 // pred_check
      _
    $region179: #{tpu_custom_call.1} parent=1 // pred_check_branch
      %875 = sbr.rel (0) target = $region181
    $region180: #{tpu_custom_call.1} parent=1 // pred_region
      %877 = dma.done [#allocation31], 512
    $region181: #{tpu_custom_call.1} parent=1 // pred_fallthru
      _
    // Predicated region
    $region182: #{tpu_custom_call.1} parent=1 // pred_check
      _
    $region183: #{tpu_custom_call.1} parent=1 // pred_check_branch
      %879 = sbr.rel (0) target = $region185
    $region184: #{tpu_custom_call.1} parent=1 // pred_region
      %881 = dma.done [#allocation31], 256
    $region185: #{tpu_custom_call.1} parent=1 // pred_fallthru
      _
    %882 = vsyncpa [#allocation3], 1
    %883 = vsyncpa [#allocation6], 1
    %884 = vsyncpa [#allocation9], 1
    %885 = vsyncpa [#allocation12], 1
    %886 = vsyncpa [#allocation15], 1
    %887 = vsyncpa [#allocation18], 1
    %888 = vsyncpa [#allocation21], 1
    %889 = vsyncpa [#allocation4], 1
    %890 = vsyncpa [#allocation25], 1
    %891 = vsyncpa [#allocation28], 1
    %892 = vsyncpa [#allocation31], 1

</llo_original>
